<compile_context>
chip_gen: v7x
topology: tpu7x:2x2x1
jax: 0.10.0
libtpu: 0.0.40
codegen_flags: <defaults>
</compile_context>

<pallas_src>
import functools

import jax
import jax.numpy as jnp
from jax.experimental import pallas as pl
from jax.experimental.pallas import tpu as pltpu

F_IN = 784          # 28 * 28
H1, H2, H3 = 256, 64, 256


def _round_up(n, m):
    return ((n + m - 1) // m) * m


def _dense_explainer_kernel(x_ref,
                            w1_ref, b1_ref,
                            w2_ref, b2_ref,
                            w3_ref, b3_ref,
                            w4_ref, b4_ref,
                            masked_ref, proba_ref):
    """One batch tile: (TB, 784) -> 256 -> 64 -> 256 -> 784, then x * proba."""
    x = x_ref[...]                                                     # f32 (TB, 784)

    # Layer 1: 784 -> 256, ReLU  (bf16 MXU operands, f32 accumulate)
    h = jnp.dot(x.astype(jnp.bfloat16), w1_ref[...],
                preferred_element_type=jnp.float32)
    h = jnp.maximum(h + b1_ref[...], 0.0)

    # Layer 2: 256 -> 64, ReLU
    h = jnp.dot(h.astype(jnp.bfloat16), w2_ref[...],
                preferred_element_type=jnp.float32)
    h = jnp.maximum(h + b2_ref[...], 0.0)

    # Layer 3: 64 -> 256, Tanh
    h = jnp.dot(h.astype(jnp.bfloat16), w3_ref[...],
                preferred_element_type=jnp.float32)
    h = jnp.tanh(h + b3_ref[...])

    # Layer 4: 256 -> 784, Sigmoid
    # (On v6e/v7x the tanh/sigmoid could be done in bf16 on the EUP for ~2x less
    #  transcendental work; kept f32 so v5e numerics match and since HBM, not EUP,
    #  is the bottleneck.)
    logits = jnp.dot(h.astype(jnp.bfloat16), w4_ref[...],
                     preferred_element_type=jnp.float32)
    proba = jax.nn.sigmoid(logits + b4_ref[...])

    proba_ref[...] = proba.astype(proba_ref.dtype)
    masked_ref[...] = (x * proba).astype(masked_ref.dtype)


def init_params(key, dtype=jnp.float32):
    """Deterministic init mimicking torch.nn.Linear default U[-1/sqrt(in), 1/sqrt(in)].
    Weights stored as (in_features, out_features) (transposed vs torch)."""
    dims = [(F_IN, H1), (H1, H2), (H2, H3), (H3, F_IN)]
    params = []
    for fan_in, fan_out in dims:
        key, kw, kb = jax.random.split(key, 3)
        bound = 1.0 / jnp.sqrt(jnp.float32(fan_in))
        w = jax.random.uniform(kw, (fan_in, fan_out), dtype, -bound, bound)
        b = jax.random.uniform(kb, (1, fan_out), dtype, -bound, bound)
        params.append((w, b))
    return params


def prepare_params(params):
    """One-time conversion to kernel layout: bf16 weights, f32 (1, N) biases.
    Done outside the per-call forward so inference doesn't re-cast weights each call."""
    return tuple((w.astype(jnp.bfloat16), b.astype(jnp.float32))
                 for (w, b) in params)


def _pick_batch_tile(B):
    # <= 512 rows per tile, multiple of 8; for B > 8 ensure >= 2 tiles so both
    # v7x TensorCores get work via the "parallel" grid axis.
    if B <= 8:
        return B                                  # full-dim block, no ragged tile
    return min(512, _round_up(-(-B // 2), 8))     # round_up(cdiv(B, 2), 8)


@functools.partial(jax.jit, static_argnames=("out_dtype",))
def dense_explainer_forward(x, prepared_params, out_dtype=jnp.float32):
    """x: (B, 1, 28, 28) float32. Returns (masked (B,1,28,28), proba (B,784))."""
    B = x.shape[0]
    x_flat = x.reshape(B, F_IN)                   # free reshape, no copy

    TB = _pick_batch_tile(B)
    grid = (pl.cdiv(B, TB),)                      # ragged last tile handled by Pallas

    (w1, b1), (w2, b2), (w3, b3), (w4, b4) = prepared_params

    act_spec = pl.BlockSpec((TB, F_IN), lambda i: (i, 0))

    def _resident(shape):
        # Full-array block + constant index map -> fetched once, stays in VMEM
        # across all grid steps.
        return pl.BlockSpec(shape, lambda i: (0, 0))

    in_specs = [
        act_spec,                       # x tile
        _resident((F_IN, H1)), _resident((1, H1)),
        _resident((H1, H2)),   _resident((1, H2)),
        _resident((H2, H3)),   _resident((1, H3)),
        _resident((H3, F_IN)), _resident((1, F_IN)),
    ]
    out_specs = (act_spec, act_spec)

    out_bytes = jnp.dtype(out_dtype).itemsize
    cost = pl.CostEstimate(
        flops=2 * B * (F_IN * H1 + H1 * H2 + H2 * H3 + H3 * F_IN),
        transcendentals=B * (H3 + F_IN),                        # tanh + sigmoid
        bytes_accessed=(w1.size + w2.size + w3.size + w4.size) * 2   # bf16 weights
                       + (b1.size + b2.size + b3.size + b4.size) * 4
                       + B * F_IN * 4                            # x read
                       + 2 * B * F_IN * out_bytes,               # masked + proba
    )

    masked_flat, proba = pl.pallas_call(
        _dense_explainer_kernel,
        grid=grid,
        in_specs=in_specs,
        out_specs=out_specs,
        out_shape=(
            jax.ShapeDtypeStruct((B, F_IN), out_dtype),
            jax.ShapeDtypeStruct((B, F_IN), out_dtype),
        ),
        compiler_params=pltpu.CompilerParams(
            dimension_semantics=("parallel",),
            vmem_limit_bytes=48 * 1024 * 1024,
        ),
        cost_estimate=cost,
    )(x_flat, w1, b1, w2, b2, w3, b3, w4, b4)

    masked = masked_flat.reshape(B, 1, 28, 28)    # free reshape
    return masked, proba


def _reference_forward(x, params):
    """Plain-JAX reference mirroring kernel numerics (bf16 operands, f32 accumulation)."""
    B = x.shape[0]
    xf = x.reshape(B, F_IN)
    (w1, b1), (w2, b2), (w3, b3), (w4, b4) = params

    def lin(h, w, b):
        return jnp.dot(h.astype(jnp.bfloat16), w.astype(jnp.bfloat16),
                       preferred_element_type=jnp.float32) + b

    h = jnp.maximum(lin(xf, w1, b1), 0.0)
    h = jnp.maximum(lin(h, w2, b2), 0.0)
    h = jnp.tanh(lin(h, w3, b3))
    proba = jax.nn.sigmoid(lin(h, w4, b4))
    return (xf * proba).reshape(B, 1, 28, 28), proba


if __name__ == "__main__":
    key = jax.random.PRNGKey(0)
    key, kx = jax.random.split(key)

    B = 2
    x = jax.random.uniform(kx, (B, 1, 28, 28), jnp.float32)  # MNIST-like input

    params = init_params(key)
    prepared = prepare_params(params)        # one-time bf16 weight conversion

    masked, proba = dense_explainer_forward(x, prepared)
    masked = jax.block_until_ready(masked)
    proba = jax.block_until_ready(proba)

    # sanity check against plain-JAX reference with matching bf16/f32 numerics
    ref_masked, ref_proba = _reference_forward(x, params)
    assert masked.shape == (B, 1, 28, 28)
    assert proba.shape == (B, F_IN)
    assert jnp.allclose(masked, ref_masked, atol=1e-3, rtol=1e-3)
    assert jnp.allclose(proba, ref_proba, atol=1e-3, rtol=1e-3)

    print("KERNEL_OK")
</pallas_src>

<mosaic_0001>
module attributes {stable_mosaic.version = 11 : i64} {
  func.func @_dense_explainer_kernel(%arg0: i32, %arg1: memref<2x784xf32, #tpu.memory_space<vmem>>, %arg2: memref<784x256xbf16, #tpu.memory_space<vmem>>, %arg3: memref<1x256xf32, #tpu.memory_space<vmem>>, %arg4: memref<256x64xbf16, #tpu.memory_space<vmem>>, %arg5: memref<1x64xf32, #tpu.memory_space<vmem>>, %arg6: memref<64x256xbf16, #tpu.memory_space<vmem>>, %arg7: memref<1x256xf32, #tpu.memory_space<vmem>>, %arg8: memref<256x784xbf16, #tpu.memory_space<vmem>>, %arg9: memref<1x784xf32, #tpu.memory_space<vmem>>, %arg10: memref<2x784xf32, #tpu.memory_space<vmem>>, %arg11: memref<2x784xf32, #tpu.memory_space<vmem>>) attributes {dimension_semantics = [#tpu.dimension_semantics<parallel>], iteration_bounds = array<i64: 1>, scalar_prefetch = 0 : i64, scratch_operands = 0 : i64, tpu.core_type = #tpu.core_type<tc>, window_params = [{transform_indices = @transform_0, window_bounds = array<i64: 2, 784>}, {pipeline_mode = #tpu.pipeline_mode<synchronous>, transform_indices = @transform_1, window_bounds = array<i64: 784, 256>}, {pipeline_mode = #tpu.pipeline_mode<synchronous>, transform_indices = @transform_2, window_bounds = array<i64: 1, 256>}, {pipeline_mode = #tpu.pipeline_mode<synchronous>, transform_indices = @transform_3, window_bounds = array<i64: 256, 64>}, {pipeline_mode = #tpu.pipeline_mode<synchronous>, transform_indices = @transform_4, window_bounds = array<i64: 1, 64>}, {pipeline_mode = #tpu.pipeline_mode<synchronous>, transform_indices = @transform_5, window_bounds = array<i64: 64, 256>}, {pipeline_mode = #tpu.pipeline_mode<synchronous>, transform_indices = @transform_6, window_bounds = array<i64: 1, 256>}, {pipeline_mode = #tpu.pipeline_mode<synchronous>, transform_indices = @transform_7, window_bounds = array<i64: 256, 784>}, {pipeline_mode = #tpu.pipeline_mode<synchronous>, transform_indices = @transform_8, window_bounds = array<i64: 1, 784>}, {transform_indices = @transform_9, window_bounds = array<i64: 2, 784>}, {transform_indices = @transform_10, window_bounds = array<i64: 2, 784>}]} {
    %c0 = arith.constant 0 : index
    %c0_0 = arith.constant 0 : index
    %0 = vector.load %arg1[%c0, %c0_0] : memref<2x784xf32, #tpu.memory_space<vmem>>, vector<2x784xf32>
    %1 = arith.truncf %0 : vector<2x784xf32> to vector<2x784xbf16>
    %c0_1 = arith.constant 0 : index
    %c0_2 = arith.constant 0 : index
    %2 = vector.load %arg2[%c0_1, %c0_2] : memref<784x256xbf16, #tpu.memory_space<vmem>>, vector<784x256xbf16>
    %cst = arith.constant dense<0.000000e+00> : vector<2x256xf32>
    %3 = tpu.matmul %1, %2, %cst {dimension_numbers = #tpu.dot_dimension_numbers<[1], [0], [0], [1], [0, 0, 1, 1], [], []>} : vector<2x784xbf16>, vector<784x256xbf16>, vector<2x256xf32> -> vector<2x256xf32>
    %c0_3 = arith.constant 0 : index
    %c0_4 = arith.constant 0 : index
    %4 = vector.load %arg3[%c0_3, %c0_4] : memref<1x256xf32, #tpu.memory_space<vmem>>, vector<1x256xf32>
    %5 = vector.broadcast %4 : vector<1x256xf32> to vector<2x256xf32>
    %6 = arith.addf %3, %5 : vector<2x256xf32>
    %cst_5 = arith.constant 0.000000e+00 : f32
    %7 = vector.broadcast %cst_5 : f32 to vector<2x256xf32>
    %8 = arith.maximumf %6, %7 : vector<2x256xf32>
    %9 = arith.truncf %8 : vector<2x256xf32> to vector<2x256xbf16>
    %c0_6 = arith.constant 0 : index
    %c0_7 = arith.constant 0 : index
    %10 = vector.load %arg4[%c0_6, %c0_7] : memref<256x64xbf16, #tpu.memory_space<vmem>>, vector<256x64xbf16>
    %cst_8 = arith.constant dense<0.000000e+00> : vector<2x64xf32>
    %11 = tpu.matmul %9, %10, %cst_8 {dimension_numbers = #tpu.dot_dimension_numbers<[1], [0], [0], [1], [0, 0, 1, 1], [], []>} : vector<2x256xbf16>, vector<256x64xbf16>, vector<2x64xf32> -> vector<2x64xf32>
    %c0_9 = arith.constant 0 : index
    %c0_10 = arith.constant 0 : index
    %12 = vector.load %arg5[%c0_9, %c0_10] : memref<1x64xf32, #tpu.memory_space<vmem>>, vector<1x64xf32>
    %13 = vector.broadcast %12 : vector<1x64xf32> to vector<2x64xf32>
    %14 = arith.addf %11, %13 : vector<2x64xf32>
    %cst_11 = arith.constant 0.000000e+00 : f32
    %15 = vector.broadcast %cst_11 : f32 to vector<2x64xf32>
    %16 = arith.maximumf %14, %15 : vector<2x64xf32>
    %17 = arith.truncf %16 : vector<2x64xf32> to vector<2x64xbf16>
    %c0_12 = arith.constant 0 : index
    %c0_13 = arith.constant 0 : index
    %18 = vector.load %arg6[%c0_12, %c0_13] : memref<64x256xbf16, #tpu.memory_space<vmem>>, vector<64x256xbf16>
    %cst_14 = arith.constant dense<0.000000e+00> : vector<2x256xf32>
    %19 = tpu.matmul %17, %18, %cst_14 {dimension_numbers = #tpu.dot_dimension_numbers<[1], [0], [0], [1], [0, 0, 1, 1], [], []>} : vector<2x64xbf16>, vector<64x256xbf16>, vector<2x256xf32> -> vector<2x256xf32>
    %c0_15 = arith.constant 0 : index
    %c0_16 = arith.constant 0 : index
    %20 = vector.load %arg7[%c0_15, %c0_16] : memref<1x256xf32, #tpu.memory_space<vmem>>, vector<1x256xf32>
    %21 = vector.broadcast %20 : vector<1x256xf32> to vector<2x256xf32>
    %22 = arith.addf %19, %21 : vector<2x256xf32>
    %23 = math.tanh %22 : vector<2x256xf32>
    %24 = arith.truncf %23 : vector<2x256xf32> to vector<2x256xbf16>
    %c0_17 = arith.constant 0 : index
    %c0_18 = arith.constant 0 : index
    %25 = vector.load %arg8[%c0_17, %c0_18] : memref<256x784xbf16, #tpu.memory_space<vmem>>, vector<256x784xbf16>
    %cst_19 = arith.constant dense<0.000000e+00> : vector<2x784xf32>
    %26 = tpu.matmul %24, %25, %cst_19 {dimension_numbers = #tpu.dot_dimension_numbers<[1], [0], [0], [1], [0, 0, 1, 1], [], []>} : vector<2x256xbf16>, vector<256x784xbf16>, vector<2x784xf32> -> vector<2x784xf32>
    %c0_20 = arith.constant 0 : index
    %c0_21 = arith.constant 0 : index
    %27 = vector.load %arg9[%c0_20, %c0_21] : memref<1x784xf32, #tpu.memory_space<vmem>>, vector<1x784xf32>
    %28 = vector.broadcast %27 : vector<1x784xf32> to vector<2x784xf32>
    %29 = arith.addf %26, %28 : vector<2x784xf32>
    %30 = arith.negf %29 : vector<2x784xf32>
    %31 = math.exp %30 : vector<2x784xf32>
    %cst_22 = arith.constant 1.000000e+00 : f32
    %32 = vector.broadcast %cst_22 : f32 to vector<2x784xf32>
    %33 = arith.addf %32, %31 : vector<2x784xf32>
    %34 = arith.divf %32, %33 : vector<2x784xf32>
    %c0_23 = arith.constant 0 : index
    %c0_24 = arith.constant 0 : index
    %35 = vector.load %arg11[%c0_23, %c0_24] : memref<2x784xf32, #tpu.memory_space<vmem>>, vector<2x784xf32>
    tpu.vector_store %arg11[%c0_23, %c0_24], %34 {strides = array<i32>} : memref<2x784xf32, #tpu.memory_space<vmem>>, vector<2x784xf32>,
    %36 = arith.mulf %0, %34 : vector<2x784xf32>
    %c0_25 = arith.constant 0 : index
    %c0_26 = arith.constant 0 : index
    %37 = vector.load %arg10[%c0_25, %c0_26] : memref<2x784xf32, #tpu.memory_space<vmem>>, vector<2x784xf32>
    tpu.vector_store %arg10[%c0_25, %c0_26], %36 {strides = array<i32>} : memref<2x784xf32, #tpu.memory_space<vmem>>, vector<2x784xf32>,
    return
  }
  func.func @transform_0(%arg0: i32) -> (i32, i32) {
    %c0_i32 = arith.constant 0 : i32
    %c0_i32_0 = arith.constant 0 : i32
    return %arg0, %c0_i32 : i32, i32
  }
  func.func @transform_1(%arg0: i32) -> (i32, i32) {
    %c0_i32 = arith.constant 0 : i32
    %c0_i32_0 = arith.constant 0 : i32
    %c0_i32_1 = arith.constant 0 : i32
    return %c0_i32, %c0_i32_0 : i32, i32
  }
  func.func @transform_2(%arg0: i32) -> (i32, i32) {
    %c0_i32 = arith.constant 0 : i32
    %c0_i32_0 = arith.constant 0 : i32
    %c0_i32_1 = arith.constant 0 : i32
    return %c0_i32, %c0_i32_0 : i32, i32
  }
  func.func @transform_3(%arg0: i32) -> (i32, i32) {
    %c0_i32 = arith.constant 0 : i32
    %c0_i32_0 = arith.constant 0 : i32
    %c0_i32_1 = arith.constant 0 : i32
    return %c0_i32, %c0_i32_0 : i32, i32
  }
  func.func @transform_4(%arg0: i32) -> (i32, i32) {
    %c0_i32 = arith.constant 0 : i32
    %c0_i32_0 = arith.constant 0 : i32
    %c0_i32_1 = arith.constant 0 : i32
    return %c0_i32, %c0_i32_0 : i32, i32
  }
  func.func @transform_5(%arg0: i32) -> (i32, i32) {
    %c0_i32 = arith.constant 0 : i32
    %c0_i32_0 = arith.constant 0 : i32
    %c0_i32_1 = arith.constant 0 : i32
    return %c0_i32, %c0_i32_0 : i32, i32
  }
  func.func @transform_6(%arg0: i32) -> (i32, i32) {
    %c0_i32 = arith.constant 0 : i32
    %c0_i32_0 = arith.constant 0 : i32
    %c0_i32_1 = arith.constant 0 : i32
    return %c0_i32, %c0_i32_0 : i32, i32
  }
  func.func @transform_7(%arg0: i32) -> (i32, i32) {
    %c0_i32 = arith.constant 0 : i32
    %c0_i32_0 = arith.constant 0 : i32
    %c0_i32_1 = arith.constant 0 : i32
    return %c0_i32, %c0_i32_0 : i32, i32
  }
  func.func @transform_8(%arg0: i32) -> (i32, i32) {
    %c0_i32 = arith.constant 0 : i32
    %c0_i32_0 = arith.constant 0 : i32
    %c0_i32_1 = arith.constant 0 : i32
    return %c0_i32, %c0_i32_0 : i32, i32
  }
  func.func @transform_9(%arg0: i32) -> (i32, i32) {
    %c0_i32 = arith.constant 0 : i32
    %c0_i32_0 = arith.constant 0 : i32
    return %arg0, %c0_i32 : i32, i32
  }
  func.func @transform_10(%arg0: i32) -> (i32, i32) {
    %c0_i32 = arith.constant 0 : i32
    %c0_i32_0 = arith.constant 0 : i32
    return %arg0, %c0_i32 : i32, i32
  }
}

</mosaic_0001>

<llo_original>
// kernel: dense_explainer_forward.1
$region0: #{dense_explainer_forward.1}
  #allocation0 [shape = 'u32[]', space=smem, size = 0x4, offset = 0x4, fixed_abs, tag = 'smem constant byte address 0x4 - core index']
  #allocation1 [shape = 'u32[144,128]{1,0:T(1,128)}', space=vmem, size = 0x12000, scoped, tag = 'internal scratch']
  %s0 = inlined_call_operand.vmem [shape: f32[2,784], index: 0, kind: input, shape index: {}]
  %s1 = inlined_call_operand.vmem [shape: bf16[784,256], index: 1, kind: input, shape index: {}]
  %s2 = inlined_call_operand.vmem [shape: f32[1,256], index: 2, kind: input, shape index: {}]
  %s3 = inlined_call_operand.vmem [shape: bf16[256,64], index: 3, kind: input, shape index: {}]
  %s4 = inlined_call_operand.vmem [shape: f32[1,64], index: 4, kind: input, shape index: {}]
  %s5 = inlined_call_operand.vmem [shape: bf16[64,256], index: 5, kind: input, shape index: {}]
  %s6 = inlined_call_operand.vmem [shape: f32[1,256], index: 6, kind: input, shape index: {}]
  %s7 = inlined_call_operand.vmem [shape: bf16[256,784], index: 7, kind: input, shape index: {}]
  %s8 = inlined_call_operand.vmem [shape: f32[1,784], index: 8, kind: input, shape index: {}]
  %s9 = inlined_call_operand.vmem [shape: f32[2,784], index: 9, kind: output, shape index: {0}]
  %s10 = inlined_call_operand.hbm [shape: f32[2,784], index: 10, kind: output, shape index: {1}]
  %11 = xla_tuple %s9, %s10
  %s12 = sld [smem:[#allocation0]]
  $region54: #{dense_explainer_forward.1} parent=0
    _
  %s14 = ssub.s32 1, %s12
  %s15 = scalar_select 0, %s14, %s12
  $region1: #{dense_explainer_forward.1} parent=0
    #allocation2 [shape = 'u8[7168]{0}', space=vmem, size = 0x1c00, scoped, tag = 'output window, operand 1, single buffered']
    #allocation3 [shape = 's32[1]{0}', space=sflag, size = 0x4, scoped, tag = 'scoped memory for dense_explainer_forward.1']
    %16 = vsyncpa [#allocation3], 0
    // Predicated region
    $region2: #{dense_explainer_forward.1} parent=1 // pred_check
      _
    $region3: #{dense_explainer_forward.1} parent=1 // pred_check_branch
      %18 = sbr.rel (0) target = $region5
    $region4: #{dense_explainer_forward.1} parent=1 // pred_region
      _
    $region5: #{dense_explainer_forward.1} parent=1 // pred_fallthru
      _
    // Predicated region
    $region6: #{dense_explainer_forward.1} parent=1 // pred_check
      _
    $region7: #{dense_explainer_forward.1} parent=1 // pred_check_branch
      %20 = sbr.rel (0) target = $region9
    $region8: #{dense_explainer_forward.1} parent=1 // pred_region
      _
    $region9: #{dense_explainer_forward.1} parent=1 // pred_fallthru
      _
    // Predicated region
    $region10: #{dense_explainer_forward.1} parent=1 // pred_check
      _
    $region11: #{dense_explainer_forward.1} parent=1 // pred_check_branch
      %22 = sbr.rel (0) target = $region13
    $region12: #{dense_explainer_forward.1} parent=1 // pred_region
      _
    $region13: #{dense_explainer_forward.1} parent=1 // pred_fallthru
      _
    // Predicated region
    $region14: #{dense_explainer_forward.1} parent=1 // pred_check
      _
    $region15: #{dense_explainer_forward.1} parent=1 // pred_check_branch
      %24 = sbr.rel (0) target = $region17
    $region16: #{dense_explainer_forward.1} parent=1 // pred_region
      _
    $region17: #{dense_explainer_forward.1} parent=1 // pred_fallthru
      _
    // Predicated region
    $region18: #{dense_explainer_forward.1} parent=1 // pred_check
      _
    $region19: #{dense_explainer_forward.1} parent=1 // pred_check_branch
      %26 = sbr.rel (0) target = $region21
    $region20: #{dense_explainer_forward.1} parent=1 // pred_region
      _
    $region21: #{dense_explainer_forward.1} parent=1 // pred_fallthru
      _
    // Predicated region
    $region22: #{dense_explainer_forward.1} parent=1 // pred_check
      _
    $region23: #{dense_explainer_forward.1} parent=1 // pred_check_branch
      %28 = sbr.rel (0) target = $region25
    $region24: #{dense_explainer_forward.1} parent=1 // pred_region
      _
    $region25: #{dense_explainer_forward.1} parent=1 // pred_fallthru
      _
    // Predicated region
    $region26: #{dense_explainer_forward.1} parent=1 // pred_check
      _
    $region27: #{dense_explainer_forward.1} parent=1 // pred_check_branch
      %30 = sbr.rel (0) target = $region29
    $region28: #{dense_explainer_forward.1} parent=1 // pred_region
      _
    $region29: #{dense_explainer_forward.1} parent=1 // pred_fallthru
      _
    // Predicated region
    $region30: #{dense_explainer_forward.1} parent=1 // pred_check
      _
    $region31: #{dense_explainer_forward.1} parent=1 // pred_check_branch
      %32 = sbr.rel (0) target = $region33
    $region32: #{dense_explainer_forward.1} parent=1 // pred_region
      _
    $region33: #{dense_explainer_forward.1} parent=1 // pred_fallthru
      _
    // Predicated region
    $region34: #{dense_explainer_forward.1} parent=1 // pred_check
      _
    $region35: #{dense_explainer_forward.1} parent=1 // pred_check_branch
      %34 = sbr.rel (0) target = $region37
    $region36: #{dense_explainer_forward.1} parent=1 // pred_region
      _
    $region37: #{dense_explainer_forward.1} parent=1 // pred_fallthru
      _
    %v36 = vld [vmem:[%s0] sm:$0xff]
    %v37 = vld [vmem:[%s0 + $0x8] sm:$0x3f]
    %v40 = vcombine.high %v36, %v36
    %v42 = vunpack.c.l.s4 1983009808
    %v43 = vunpack.c.0.s8 %v42
    %v44 = vlaneseq
    %v45 = vshrl.u32 %v44, 7
    %v46 = vsub.s32 %v43, %v45
    %v47 = vrot.slane %v36, %v46
    %v49 = vunpack.c.l.s4 1983009808
    %v50 = vunpack.c.0.s8 %v49
    %v51 = vlaneseq
    %v52 = vshrl.u32 %v51, 7
    %v53 = vsub.s32 %v50, %v52
    %v54 = vrot.slane %v40, %v53
    %v55 = vcombine.high %v47, %v47
    %v56 = vcombine.high %v54, %v54
    %v57 = vcombine.high %v37, %v37
    %v59 = vunpack.c.l.s4 1983009808
    %v60 = vunpack.c.0.s8 %v59
    %v61 = vlaneseq
    %v62 = vshrl.u32 %v61, 7
    %v63 = vsub.s32 %v60, %v62
    %v64 = vrot.slane %v37, %v63
    %v66 = vunpack.c.l.s4 1983009808
    %v67 = vunpack.c.0.s8 %v66
    %v68 = vlaneseq
    %v69 = vshrl.u32 %v68, 7
    %v70 = vsub.s32 %v67, %v69
    %v71 = vrot.slane %v57, %v70
    %v72 = vcombine.high %v64, %v64
    %v80 = vpack.c.bf16 %v47, %v47
    %v81 = vpack.c.bf16 %v55, %v55
    %v82 = vpack.c.bf16 %v54, %v54
    %v83 = vpack.c.bf16 %v56, %v56
    %v84 = vpack.c.bf16 %v64, %v64
    %v85 = vpack.c.bf16 %v72, %v72
    %v86 = vpack.c.bf16 %v71, %v71
    %v87 = vld [vmem:[%s1] sm:$0xff]
    %v88 = vld [vmem:[%s1 + $0x8] sm:$0xff]
    %v89 = vld [vmem:[%s1 + $0x10] sm:$0xff]
    %v90 = vld [vmem:[%s1 + $0x18] sm:$0xff]
    %v91 = vld [vmem:[%s1 + $0x20] sm:$0xff]
    %v92 = vld [vmem:[%s1 + $0x28] sm:$0xff]
    %v93 = vld [vmem:[%s1 + $0x30] sm:$0xff]
    %v94 = vld [vmem:[%s1 + $0x38] sm:$0xff]
    %v95 = vld [vmem:[%s1 + $0x40] sm:$0xff]
    %v96 = vld [vmem:[%s1 + $0x48] sm:$0xff]
    %v97 = vld [vmem:[%s1 + $0x50] sm:$0xff]
    %v98 = vld [vmem:[%s1 + $0x58] sm:$0xff]
    %v99 = vld [vmem:[%s1 + $0x60] sm:$0xff]
    %v100 = vld [vmem:[%s1 + $0x68] sm:$0xff]
    %v101 = vld [vmem:[%s1 + $0x70] sm:$0xff]
    %v102 = vld [vmem:[%s1 + $0x78] sm:$0xff]
    %v103 = vld [vmem:[%s1 + $0x80] sm:$0xff]
    %v104 = vld [vmem:[%s1 + $0x88] sm:$0xff]
    %v105 = vld [vmem:[%s1 + $0x90] sm:$0xff]
    %v106 = vld [vmem:[%s1 + $0x98] sm:$0xff]
    %v107 = vld [vmem:[%s1 + $0xa0] sm:$0xff]
    %v108 = vld [vmem:[%s1 + $0xa8] sm:$0xff]
    %v109 = vld [vmem:[%s1 + $0xb0] sm:$0xff]
    %v110 = vld [vmem:[%s1 + $0xb8] sm:$0xff]
    %v111 = vld [vmem:[%s1 + $0xc0] sm:$0xff]
    %v112 = vld [vmem:[%s1 + $0xc8] sm:$0xff]
    %v113 = vld [vmem:[%s1 + $0xd0] sm:$0xff]
    %v114 = vld [vmem:[%s1 + $0xd8] sm:$0xff]
    %v115 = vld [vmem:[%s1 + $0xe0] sm:$0xff]
    %v116 = vld [vmem:[%s1 + $0xe8] sm:$0xff]
    %v117 = vld [vmem:[%s1 + $0xf0] sm:$0xff]
    %v118 = vld [vmem:[%s1 + $0xf8] sm:$0xff]
    %v119 = vld [vmem:[%s1 + $0x100] sm:$0xff]
    %v120 = vld [vmem:[%s1 + $0x108] sm:$0xff]
    %v121 = vld [vmem:[%s1 + $0x110] sm:$0xff]
    %v122 = vld [vmem:[%s1 + $0x118] sm:$0xff]
    %v123 = vld [vmem:[%s1 + $0x120] sm:$0xff]
    %v124 = vld [vmem:[%s1 + $0x128] sm:$0xff]
    %v125 = vld [vmem:[%s1 + $0x130] sm:$0xff]
    %v126 = vld [vmem:[%s1 + $0x138] sm:$0xff]
    %v127 = vld [vmem:[%s1 + $0x140] sm:$0xff]
    %v128 = vld [vmem:[%s1 + $0x148] sm:$0xff]
    %v129 = vld [vmem:[%s1 + $0x150] sm:$0xff]
    %v130 = vld [vmem:[%s1 + $0x158] sm:$0xff]
    %v131 = vld [vmem:[%s1 + $0x160] sm:$0xff]
    %v132 = vld [vmem:[%s1 + $0x168] sm:$0xff]
    %v133 = vld [vmem:[%s1 + $0x170] sm:$0xff]
    %v134 = vld [vmem:[%s1 + $0x178] sm:$0xff]
    %v135 = vld [vmem:[%s1 + $0x180] sm:$0xff]
    %v136 = vld [vmem:[%s1 + $0x188] sm:$0xff]
    %v137 = vld [vmem:[%s1 + $0x190] sm:$0xff]
    %v138 = vld [vmem:[%s1 + $0x198] sm:$0xff]
    %v139 = vld [vmem:[%s1 + $0x1a0] sm:$0xff]
    %v140 = vld [vmem:[%s1 + $0x1a8] sm:$0xff]
    %v141 = vld [vmem:[%s1 + $0x1b0] sm:$0xff]
    %v142 = vld [vmem:[%s1 + $0x1b8] sm:$0xff]
    %v143 = vld [vmem:[%s1 + $0x1c0] sm:$0xff]
    %v144 = vld [vmem:[%s1 + $0x1c8] sm:$0xff]
    %v145 = vld [vmem:[%s1 + $0x1d0] sm:$0xff]
    %v146 = vld [vmem:[%s1 + $0x1d8] sm:$0xff]
    %v147 = vld [vmem:[%s1 + $0x1e0] sm:$0xff]
    %v148 = vld [vmem:[%s1 + $0x1e8] sm:$0xff]
    %v149 = vld [vmem:[%s1 + $0x1f0] sm:$0xff]
    %v150 = vld [vmem:[%s1 + $0x1f8] sm:$0xff]
    %v151 = vld [vmem:[%s1 + $0x200] sm:$0xff]
    %v152 = vld [vmem:[%s1 + $0x208] sm:$0xff]
    %v153 = vld [vmem:[%s1 + $0x210] sm:$0xff]
    %v154 = vld [vmem:[%s1 + $0x218] sm:$0xff]
    %v155 = vld [vmem:[%s1 + $0x220] sm:$0xff]
    %v156 = vld [vmem:[%s1 + $0x228] sm:$0xff]
    %v157 = vld [vmem:[%s1 + $0x230] sm:$0xff]
    %v158 = vld [vmem:[%s1 + $0x238] sm:$0xff]
    %v159 = vld [vmem:[%s1 + $0x240] sm:$0xff]
    %v160 = vld [vmem:[%s1 + $0x248] sm:$0xff]
    %v161 = vld [vmem:[%s1 + $0x250] sm:$0xff]
    %v162 = vld [vmem:[%s1 + $0x258] sm:$0xff]
    %v163 = vld [vmem:[%s1 + $0x260] sm:$0xff]
    %v164 = vld [vmem:[%s1 + $0x268] sm:$0xff]
    %v165 = vld [vmem:[%s1 + $0x270] sm:$0xff]
    %v166 = vld [vmem:[%s1 + $0x278] sm:$0xff]
    %v167 = vld [vmem:[%s1 + $0x280] sm:$0xff]
    %v168 = vld [vmem:[%s1 + $0x288] sm:$0xff]
    %v169 = vld [vmem:[%s1 + $0x290] sm:$0xff]
    %v170 = vld [vmem:[%s1 + $0x298] sm:$0xff]
    %v171 = vld [vmem:[%s1 + $0x2a0] sm:$0xff]
    %v172 = vld [vmem:[%s1 + $0x2a8] sm:$0xff]
    %v173 = vld [vmem:[%s1 + $0x2b0] sm:$0xff]
    %v174 = vld [vmem:[%s1 + $0x2b8] sm:$0xff]
    %v175 = vld [vmem:[%s1 + $0x2c0] sm:$0xff]
    %v176 = vld [vmem:[%s1 + $0x2c8] sm:$0xff]
    %v177 = vld [vmem:[%s1 + $0x2d0] sm:$0xff]
    %v178 = vld [vmem:[%s1 + $0x2d8] sm:$0xff]
    %v179 = vld [vmem:[%s1 + $0x2e0] sm:$0xff]
    %v180 = vld [vmem:[%s1 + $0x2e8] sm:$0xff]
    %v181 = vld [vmem:[%s1 + $0x2f0] sm:$0xff]
    %v182 = vld [vmem:[%s1 + $0x2f8] sm:$0xff]
    %v183 = vld [vmem:[%s1 + $0x300] sm:$0xff]
    %v184 = vld [vmem:[%s1 + $0x308] sm:$0xff]
    %v185 = vld [vmem:[%s2] sm:$0x3]
    %v187 = vlaneseq
    %v188 = vshrl.u32 %v187, 7
    %v189 = vsub.s32 0, %v188
    %v190 = vrot.slane %v185, %v189
    %v191 = vlaneseq
    %v192 = vshrl.u32 %v191, 7
    %v193 = vsub.s32 1, %v192
    %v194 = vrot.slane %v185, %v193
    %v295 = vunpack.c.l.b16 %v87
    %v296 = vunpack.c.h.b16 %v87
    %v297 = vunpack.c.l.b16 %v88
    %v298 = vunpack.c.h.b16 %v88
    %v299 = vunpack.c.l.b16 %v89
    %v300 = vunpack.c.h.b16 %v89
    %v301 = vunpack.c.l.b16 %v90
    %v302 = vunpack.c.h.b16 %v90
    %v303 = vunpack.c.l.b16 %v91
    %v304 = vunpack.c.h.b16 %v91
    %v305 = vunpack.c.l.b16 %v92
    %v306 = vunpack.c.h.b16 %v92
    %v307 = vunpack.c.l.b16 %v93
    %v308 = vunpack.c.h.b16 %v93
    %v309 = vunpack.c.l.b16 %v94
    %v310 = vunpack.c.h.b16 %v94
    %v311 = vunpack.c.l.b16 %v95
    %v312 = vunpack.c.h.b16 %v95
    %v313 = vunpack.c.l.b16 %v96
    %v314 = vunpack.c.h.b16 %v96
    %v315 = vunpack.c.l.b16 %v97
    %v316 = vunpack.c.h.b16 %v97
    %v317 = vunpack.c.l.b16 %v98
    %v318 = vunpack.c.h.b16 %v98
    %v319 = vunpack.c.l.b16 %v99
    %v320 = vunpack.c.h.b16 %v99
    %v321 = vunpack.c.l.b16 %v100
    %v322 = vunpack.c.h.b16 %v100
    %v323 = vunpack.c.l.b16 %v101
    %v324 = vunpack.c.h.b16 %v101
    %v325 = vunpack.c.l.b16 %v102
    %v326 = vunpack.c.h.b16 %v102
    %v327 = vunpack.c.l.b16 %v103
    %v328 = vunpack.c.h.b16 %v103
    %v329 = vunpack.c.l.b16 %v104
    %v330 = vunpack.c.h.b16 %v104
    %v331 = vunpack.c.l.b16 %v105
    %v332 = vunpack.c.h.b16 %v105
    %v333 = vunpack.c.l.b16 %v106
    %v334 = vunpack.c.h.b16 %v106
    %v335 = vunpack.c.l.b16 %v107
    %v336 = vunpack.c.h.b16 %v107
    %v337 = vunpack.c.l.b16 %v108
    %v338 = vunpack.c.h.b16 %v108
    %v339 = vunpack.c.l.b16 %v109
    %v340 = vunpack.c.h.b16 %v109
    %v341 = vunpack.c.l.b16 %v110
    %v342 = vunpack.c.h.b16 %v110
    %v343 = vunpack.c.l.b16 %v111
    %v344 = vunpack.c.h.b16 %v111
    %v345 = vunpack.c.l.b16 %v112
    %v346 = vunpack.c.h.b16 %v112
    %v347 = vunpack.c.l.b16 %v113
    %v348 = vunpack.c.h.b16 %v113
    %v349 = vunpack.c.l.b16 %v114
    %v350 = vunpack.c.h.b16 %v114
    %v351 = vunpack.c.l.b16 %v115
    %v352 = vunpack.c.h.b16 %v115
    %v353 = vunpack.c.l.b16 %v116
    %v354 = vunpack.c.h.b16 %v116
    %v355 = vunpack.c.l.b16 %v117
    %v356 = vunpack.c.h.b16 %v117
    %v357 = vunpack.c.l.b16 %v118
    %v358 = vunpack.c.h.b16 %v118
    %v359 = vunpack.c.l.b16 %v119
    %v360 = vunpack.c.h.b16 %v119
    %v361 = vunpack.c.l.b16 %v120
    %v362 = vunpack.c.h.b16 %v120
    %v363 = vunpack.c.l.b16 %v121
    %v364 = vunpack.c.h.b16 %v121
    %v365 = vunpack.c.l.b16 %v122
    %v366 = vunpack.c.h.b16 %v122
    %v367 = vunpack.c.l.b16 %v123
    %v368 = vunpack.c.h.b16 %v123
    %v369 = vunpack.c.l.b16 %v124
    %v370 = vunpack.c.h.b16 %v124
    %v371 = vunpack.c.l.b16 %v125
    %v372 = vunpack.c.h.b16 %v125
    %v373 = vunpack.c.l.b16 %v126
    %v374 = vunpack.c.h.b16 %v126
    %v375 = vunpack.c.l.b16 %v127
    %v376 = vunpack.c.h.b16 %v127
    %v377 = vunpack.c.l.b16 %v128
    %v378 = vunpack.c.h.b16 %v128
    %v379 = vunpack.c.l.b16 %v129
    %v380 = vunpack.c.h.b16 %v129
    %v381 = vunpack.c.l.b16 %v130
    %v382 = vunpack.c.h.b16 %v130
    %v383 = vunpack.c.l.b16 %v131
    %v384 = vunpack.c.h.b16 %v131
    %v385 = vunpack.c.l.b16 %v132
    %v386 = vunpack.c.h.b16 %v132
    %v387 = vunpack.c.l.b16 %v133
    %v388 = vunpack.c.h.b16 %v133
    %v389 = vunpack.c.l.b16 %v134
    %v390 = vunpack.c.h.b16 %v134
    %v391 = vunpack.c.l.b16 %v135
    %v392 = vunpack.c.h.b16 %v135
    %v393 = vunpack.c.l.b16 %v136
    %v394 = vunpack.c.h.b16 %v136
    %v395 = vunpack.c.l.b16 %v137
    %v396 = vunpack.c.h.b16 %v137
    %v397 = vunpack.c.l.b16 %v138
    %v398 = vunpack.c.h.b16 %v138
    %v399 = vunpack.c.l.b16 %v139
    %v400 = vunpack.c.h.b16 %v139
    %v401 = vunpack.c.l.b16 %v140
    %v402 = vunpack.c.h.b16 %v140
    %v403 = vunpack.c.l.b16 %v141
    %v404 = vunpack.c.h.b16 %v141
    %v405 = vunpack.c.l.b16 %v142
    %v406 = vunpack.c.h.b16 %v142
    %v407 = vunpack.c.l.b16 %v143
    %v408 = vunpack.c.h.b16 %v143
    %v409 = vunpack.c.l.b16 %v144
    %v410 = vunpack.c.h.b16 %v144
    %v411 = vunpack.c.l.b16 %v145
    %v412 = vunpack.c.h.b16 %v145
    %v413 = vunpack.c.l.b16 %v146
    %v414 = vunpack.c.h.b16 %v146
    %v415 = vunpack.c.l.b16 %v147
    %v416 = vunpack.c.h.b16 %v147
    %v417 = vunpack.c.l.b16 %v148
    %v418 = vunpack.c.h.b16 %v148
    %v419 = vunpack.c.l.b16 %v149
    %v420 = vunpack.c.h.b16 %v149
    %v421 = vunpack.c.l.b16 %v150
    %v422 = vunpack.c.h.b16 %v150
    %v423 = vunpack.c.l.b16 %v151
    %v424 = vunpack.c.h.b16 %v151
    %v425 = vunpack.c.l.b16 %v152
    %v426 = vunpack.c.h.b16 %v152
    %v427 = vunpack.c.l.b16 %v153
    %v428 = vunpack.c.h.b16 %v153
    %v429 = vunpack.c.l.b16 %v154
    %v430 = vunpack.c.h.b16 %v154
    %v431 = vunpack.c.l.b16 %v155
    %v432 = vunpack.c.h.b16 %v155
    %v433 = vunpack.c.l.b16 %v156
    %v434 = vunpack.c.h.b16 %v156
    %v435 = vunpack.c.l.b16 %v157
    %v436 = vunpack.c.h.b16 %v157
    %v437 = vunpack.c.l.b16 %v158
    %v438 = vunpack.c.h.b16 %v158
    %v439 = vunpack.c.l.b16 %v159
    %v440 = vunpack.c.h.b16 %v159
    %v441 = vunpack.c.l.b16 %v160
    %v442 = vunpack.c.h.b16 %v160
    %v443 = vunpack.c.l.b16 %v161
    %v444 = vunpack.c.h.b16 %v161
    %v445 = vunpack.c.l.b16 %v162
    %v446 = vunpack.c.h.b16 %v162
    %v447 = vunpack.c.l.b16 %v163
    %v448 = vunpack.c.h.b16 %v163
    %v449 = vunpack.c.l.b16 %v164
    %v450 = vunpack.c.h.b16 %v164
    %v451 = vunpack.c.l.b16 %v165
    %v452 = vunpack.c.h.b16 %v165
    %v453 = vunpack.c.l.b16 %v166
    %v454 = vunpack.c.h.b16 %v166
    %v455 = vunpack.c.l.b16 %v167
    %v456 = vunpack.c.h.b16 %v167
    %v457 = vunpack.c.l.b16 %v168
    %v458 = vunpack.c.h.b16 %v168
    %v459 = vunpack.c.l.b16 %v169
    %v460 = vunpack.c.h.b16 %v169
    %v461 = vunpack.c.l.b16 %v170
    %v462 = vunpack.c.h.b16 %v170
    %v463 = vunpack.c.l.b16 %v171
    %v464 = vunpack.c.h.b16 %v171
    %v465 = vunpack.c.l.b16 %v172
    %v466 = vunpack.c.h.b16 %v172
    %v467 = vunpack.c.l.b16 %v173
    %v468 = vunpack.c.h.b16 %v173
    %v469 = vunpack.c.l.b16 %v174
    %v470 = vunpack.c.h.b16 %v174
    %v471 = vunpack.c.l.b16 %v175
    %v472 = vunpack.c.h.b16 %v175
    %v473 = vunpack.c.l.b16 %v176
    %v474 = vunpack.c.h.b16 %v176
    %v475 = vunpack.c.l.b16 %v177
    %v476 = vunpack.c.h.b16 %v177
    %v477 = vunpack.c.l.b16 %v178
    %v478 = vunpack.c.h.b16 %v178
    %v479 = vunpack.c.l.b16 %v179
    %v480 = vunpack.c.h.b16 %v179
    %v481 = vunpack.c.l.b16 %v180
    %v482 = vunpack.c.h.b16 %v180
    %v483 = vunpack.c.l.b16 %v181
    %v484 = vunpack.c.h.b16 %v181
    %v485 = vunpack.c.l.b16 %v182
    %v486 = vunpack.c.h.b16 %v182
    %v487 = vunpack.c.l.b16 %v183
    %v488 = vunpack.c.h.b16 %v183
    %v489 = vunpack.c.l.b16 %v184
    %v490 = vunpack.c.h.b16 %v184
    %v491 = vpack.c.b16 %v297, %v295
    %v492 = vpack.c.b16 %v298, %v296
    %v493 = vpack.c.b16 %v301, %v299
    %v494 = vpack.c.b16 %v302, %v300
    %v495 = vpack.c.b16 %v305, %v303
    %v496 = vpack.c.b16 %v306, %v304
    %v497 = vpack.c.b16 %v309, %v307
    %v498 = vpack.c.b16 %v310, %v308
    %v499 = vpack.c.b16 %v313, %v311
    %v500 = vpack.c.b16 %v314, %v312
    %v501 = vpack.c.b16 %v317, %v315
    %v502 = vpack.c.b16 %v318, %v316
    %v503 = vpack.c.b16 %v321, %v319
    %v504 = vpack.c.b16 %v322, %v320
    %v505 = vpack.c.b16 %v325, %v323
    %v506 = vpack.c.b16 %v326, %v324
    %v507 = vpack.c.b16 %v329, %v327
    %v508 = vpack.c.b16 %v330, %v328
    %v509 = vpack.c.b16 %v333, %v331
    %v510 = vpack.c.b16 %v334, %v332
    %v511 = vpack.c.b16 %v337, %v335
    %v512 = vpack.c.b16 %v338, %v336
    %v513 = vpack.c.b16 %v341, %v339
    %v514 = vpack.c.b16 %v342, %v340
    %v515 = vpack.c.b16 %v345, %v343
    %v516 = vpack.c.b16 %v346, %v344
    %v517 = vpack.c.b16 %v349, %v347
    %v518 = vpack.c.b16 %v350, %v348
    %v519 = vpack.c.b16 %v353, %v351
    %v520 = vpack.c.b16 %v354, %v352
    %v521 = vpack.c.b16 %v357, %v355
    %v522 = vpack.c.b16 %v358, %v356
    %v523 = vpack.c.b16 %v361, %v359
    %v524 = vpack.c.b16 %v362, %v360
    %v525 = vpack.c.b16 %v365, %v363
    %v526 = vpack.c.b16 %v366, %v364
    %v527 = vpack.c.b16 %v369, %v367
    %v528 = vpack.c.b16 %v370, %v368
    %v529 = vpack.c.b16 %v373, %v371
    %v530 = vpack.c.b16 %v374, %v372
    %v531 = vpack.c.b16 %v377, %v375
    %v532 = vpack.c.b16 %v378, %v376
    %v533 = vpack.c.b16 %v381, %v379
    %v534 = vpack.c.b16 %v382, %v380
    %v535 = vpack.c.b16 %v385, %v383
    %v536 = vpack.c.b16 %v386, %v384
    %v537 = vpack.c.b16 %v389, %v387
    %v538 = vpack.c.b16 %v390, %v388
    %v539 = vpack.c.b16 %v393, %v391
    %v540 = vpack.c.b16 %v394, %v392
    %v541 = vpack.c.b16 %v397, %v395
    %v542 = vpack.c.b16 %v398, %v396
    %v543 = vpack.c.b16 %v401, %v399
    %v544 = vpack.c.b16 %v402, %v400
    %v545 = vpack.c.b16 %v405, %v403
    %v546 = vpack.c.b16 %v406, %v404
    %v547 = vpack.c.b16 %v409, %v407
    %v548 = vpack.c.b16 %v410, %v408
    %v549 = vpack.c.b16 %v413, %v411
    %v550 = vpack.c.b16 %v414, %v412
    %v551 = vpack.c.b16 %v417, %v415
    %v552 = vpack.c.b16 %v418, %v416
    %v553 = vpack.c.b16 %v421, %v419
    %v554 = vpack.c.b16 %v422, %v420
    %v555 = vpack.c.b16 %v425, %v423
    %v556 = vpack.c.b16 %v426, %v424
    %v557 = vpack.c.b16 %v429, %v427
    %v558 = vpack.c.b16 %v430, %v428
    %v559 = vpack.c.b16 %v433, %v431
    %v560 = vpack.c.b16 %v434, %v432
    %v561 = vpack.c.b16 %v437, %v435
    %v562 = vpack.c.b16 %v438, %v436
    %v563 = vpack.c.b16 %v441, %v439
    %v564 = vpack.c.b16 %v442, %v440
    %v565 = vpack.c.b16 %v445, %v443
    %v566 = vpack.c.b16 %v446, %v444
    %v567 = vpack.c.b16 %v449, %v447
    %v568 = vpack.c.b16 %v450, %v448
    %v569 = vpack.c.b16 %v453, %v451
    %v570 = vpack.c.b16 %v454, %v452
    %v571 = vpack.c.b16 %v457, %v455
    %v572 = vpack.c.b16 %v458, %v456
    %v573 = vpack.c.b16 %v461, %v459
    %v574 = vpack.c.b16 %v462, %v460
    %v575 = vpack.c.b16 %v465, %v463
    %v576 = vpack.c.b16 %v466, %v464
    %v577 = vpack.c.b16 %v469, %v467
    %v578 = vpack.c.b16 %v470, %v468
    %v579 = vpack.c.b16 %v473, %v471
    %v580 = vpack.c.b16 %v474, %v472
    %v581 = vpack.c.b16 %v477, %v475
    %v582 = vpack.c.b16 %v478, %v476
    %v583 = vpack.c.b16 %v481, %v479
    %v584 = vpack.c.b16 %v482, %v480
    %v585 = vpack.c.b16 %v485, %v483
    %v586 = vpack.c.b16 %v486, %v484
    %v587 = vpack.c.b16 %v489, %v487
    %v588 = vpack.c.b16 %v490, %v488
    %vm687 = vcmask 130048
    %v689 = vsel %vm687, %v86, 0
    %691 = vmatprep.subr.bf16.mxu0 %v492
    %692 = vmatpush1.bf16.msra.mxu0 %v491
    %693 = vmatprep.subr.bf16.mxu0 %v494
    %694 = vmatpush1.bf16.msra.mxu0 %v493
    %695 = vmatprep.subr.bf16.mxu0 %v496
    %696 = vmatpush1.bf16.msra.mxu0 %v495
    %697 = vmatprep.subr.bf16.mxu0 %v498
    %698 = vmatpush1.bf16.msra.mxu0 %v497
    %699 = vmatprep.subr.bf16.mxu0 %v500
    %700 = vmatpush1.bf16.msra.mxu0 %v499
    %701 = vmatprep.subr.bf16.mxu0 %v502
    %702 = vmatpush1.bf16.msra.mxu0 %v501
    %703 = vmatprep.subr.bf16.mxu0 %v504
    %704 = vmatpush1.bf16.msra.mxu0 %v503
    %705 = vmatprep.subr.bf16.mxu0 %v506
    %706 = vmatpush1.bf16.msra.mxu0 %v505
    %707 = vmatprep.subr.bf16.mxu0 %v508
    %708 = vmatpush1.bf16.msra.mxu0 %v507
    %709 = vmatprep.subr.bf16.mxu0 %v510
    %710 = vmatpush1.bf16.msra.mxu0 %v509
    %711 = vmatprep.subr.bf16.mxu0 %v512
    %712 = vmatpush1.bf16.msra.mxu0 %v511
    %713 = vmatprep.subr.bf16.mxu0 %v514
    %714 = vmatpush1.bf16.msra.mxu0 %v513
    %715 = vmatprep.subr.bf16.mxu0 %v516
    %716 = vmatpush1.bf16.msra.mxu0 %v515
    %717 = vmatprep.subr.bf16.mxu0 %v518
    %718 = vmatpush1.bf16.msra.mxu0 %v517
    %719 = vmatprep.subr.bf16.mxu0 %v520
    %720 = vmatpush1.bf16.msra.mxu0 %v519
    %721 = vmatprep.subr.bf16.mxu0 %v522
    %722 = vmatpush1.bf16.msra.mxu0 %v521
    %723 = vmatprep.mubr.bf16.mxu0 %v81
    %724 = vmatmul.mubr.bf16.gmra.mrb[0].mxu0 %v80
    %v725 = vpop.f32.mrb[0].mxu0
    %v726 = vadd.f32 %v190, %v725
    %v727 = vpop.f32.mrb[0].mxu0
    %v728 = vadd.f32 %v194, %v727
    %v729 = vpop.f32.mrb[0].mxu0
    %v730 = vpop.f32.mrb[0].mxu0
    %731 = vdwg.mxu0
    %732 = vmatprep.subr.bf16.mxu0 %v524
    %733 = vmatpush1.bf16.msra.mxu0 %v523
    %734 = vmatprep.subr.bf16.mxu0 %v526
    %735 = vmatpush1.bf16.msra.mxu0 %v525
    %736 = vmatprep.subr.bf16.mxu0 %v528
    %737 = vmatpush1.bf16.msra.mxu0 %v527
    %738 = vmatprep.subr.bf16.mxu0 %v530
    %739 = vmatpush1.bf16.msra.mxu0 %v529
    %740 = vmatprep.subr.bf16.mxu0 %v532
    %741 = vmatpush1.bf16.msra.mxu0 %v531
    %742 = vmatprep.subr.bf16.mxu0 %v534
    %743 = vmatpush1.bf16.msra.mxu0 %v533
    %744 = vmatprep.subr.bf16.mxu0 %v536
    %745 = vmatpush1.bf16.msra.mxu0 %v535
    %746 = vmatprep.subr.bf16.mxu0 %v538
    %747 = vmatpush1.bf16.msra.mxu0 %v537
    %748 = vmatprep.subr.bf16.mxu0 %v540
    %749 = vmatpush1.bf16.msra.mxu0 %v539
    %750 = vmatprep.subr.bf16.mxu0 %v542
    %751 = vmatpush1.bf16.msra.mxu0 %v541
    %752 = vmatprep.subr.bf16.mxu0 %v544
    %753 = vmatpush1.bf16.msra.mxu0 %v543
    %754 = vmatprep.subr.bf16.mxu0 %v546
    %755 = vmatpush1.bf16.msra.mxu0 %v545
    %756 = vmatprep.subr.bf16.mxu0 %v548
    %757 = vmatpush1.bf16.msra.mxu0 %v547
    %758 = vmatprep.subr.bf16.mxu0 %v550
    %759 = vmatpush1.bf16.msra.mxu0 %v549
    %760 = vmatprep.subr.bf16.mxu0 %v552
    %761 = vmatpush1.bf16.msra.mxu0 %v551
    %762 = vmatprep.subr.bf16.mxu0 %v554
    %763 = vmatpush1.bf16.msra.mxu0 %v553
    %764 = vmatprep.mubr.bf16.mxu0 %v83
    %765 = vmatmul.mubr.bf16.gmra.mrb[0].mxu0 %v82
    %v766 = vpop.f32.mrb[0].mxu0
    %v767 = vadd.f32 %v726, %v766
    %v768 = vpop.f32.mrb[0].mxu0
    %v769 = vadd.f32 %v728, %v768
    %v770 = vpop.f32.mrb[0].mxu0
    %v771 = vpop.f32.mrb[0].mxu0
    %772 = vdwg.mxu0
    %773 = vmatprep.subr.bf16.mxu0 %v556
    %774 = vmatpush1.bf16.msra.mxu0 %v555
    %775 = vmatprep.subr.bf16.mxu0 %v558
    %776 = vmatpush1.bf16.msra.mxu0 %v557
    %777 = vmatprep.subr.bf16.mxu0 %v560
    %778 = vmatpush1.bf16.msra.mxu0 %v559
    %779 = vmatprep.subr.bf16.mxu0 %v562
    %780 = vmatpush1.bf16.msra.mxu0 %v561
    %781 = vmatprep.subr.bf16.mxu0 %v564
    %782 = vmatpush1.bf16.msra.mxu0 %v563
    %783 = vmatprep.subr.bf16.mxu0 %v566
    %784 = vmatpush1.bf16.msra.mxu0 %v565
    %785 = vmatprep.subr.bf16.mxu0 %v568
    %786 = vmatpush1.bf16.msra.mxu0 %v567
    %787 = vmatprep.subr.bf16.mxu0 %v570
    %788 = vmatpush1.bf16.msra.mxu0 %v569
    %789 = vmatprep.subr.bf16.mxu0 %v572
    %790 = vmatpush1.bf16.msra.mxu0 %v571
    %791 = vmatprep.subr.bf16.mxu0 %v574
    %792 = vmatpush1.bf16.msra.mxu0 %v573
    %793 = vmatprep.subr.bf16.mxu0 %v576
    %794 = vmatpush1.bf16.msra.mxu0 %v575
    %795 = vmatprep.subr.bf16.mxu0 %v578
    %796 = vmatpush1.bf16.msra.mxu0 %v577
    %797 = vmatprep.subr.bf16.mxu0 %v580
    %798 = vmatpush1.bf16.msra.mxu0 %v579
    %799 = vmatprep.subr.bf16.mxu0 %v582
    %800 = vmatpush1.bf16.msra.mxu0 %v581
    %801 = vmatprep.subr.bf16.mxu0 %v584
    %802 = vmatpush1.bf16.msra.mxu0 %v583
    %803 = vmatprep.subr.bf16.mxu0 %v586
    %804 = vmatpush1.bf16.msra.mxu0 %v585
    %805 = vmatprep.mubr.bf16.mxu0 %v85
    %806 = vmatmul.mubr.bf16.gmra.mrb[0].mxu0 %v84
    %v807 = vpop.f32.mrb[0].mxu0
    %v808 = vadd.f32 %v767, %v807
    %v809 = vpop.f32.mrb[0].mxu0
    %v810 = vadd.f32 %v769, %v809
    %v811 = vpop.f32.mrb[0].mxu0
    %v812 = vpop.f32.mrb[0].mxu0
    %813 = vdwg.mxu0
    %814 = vmatprep.subr.bf16.mxu0 %v588
    %815 = vmatpush1.bf16.msra.mxu0 %v587
    %816 = vmatprep.subr.bf16.mxu0 0
    %817 = vmatpush1.bf16.msra.mxu0 0
    %818 = vmatprep.subr.bf16.mxu0 0
    %819 = vmatpush1.bf16.msra.mxu0 0
    %820 = vmatprep.subr.bf16.mxu0 0
    %821 = vmatpush1.bf16.msra.mxu0 0
    %822 = vmatprep.subr.bf16.mxu0 0
    %823 = vmatpush1.bf16.msra.mxu0 0
    %824 = vmatprep.subr.bf16.mxu0 0
    %825 = vmatpush1.bf16.msra.mxu0 0
    %826 = vmatprep.subr.bf16.mxu0 0
    %827 = vmatpush1.bf16.msra.mxu0 0
    %828 = vmatprep.subr.bf16.mxu0 0
    %829 = vmatpush1.bf16.msra.mxu0 0
    %830 = vmatprep.subr.bf16.mxu0 0
    %831 = vmatpush1.bf16.msra.mxu0 0
    %832 = vmatprep.subr.bf16.mxu0 0
    %833 = vmatpush1.bf16.msra.mxu0 0
    %834 = vmatprep.subr.bf16.mxu0 0
    %835 = vmatpush1.bf16.msra.mxu0 0
    %836 = vmatprep.subr.bf16.mxu0 0
    %837 = vmatpush1.bf16.msra.mxu0 0
    %838 = vmatprep.subr.bf16.mxu0 0
    %839 = vmatpush1.bf16.msra.mxu0 0
    %840 = vmatprep.subr.bf16.mxu0 0
    %841 = vmatpush1.bf16.msra.mxu0 0
    %842 = vmatprep.subr.bf16.mxu0 0
    %843 = vmatpush1.bf16.msra.mxu0 0
    %844 = vmatprep.subr.bf16.mxu0 0
    %845 = vmatpush1.bf16.msra.mxu0 0
    %846 = vmatprep.mubr.bf16.mxu0 0
    %847 = vmatmul.mubr.bf16.gmra.mrb[0].mxu0 %v689
    %v848 = vpop.f32.mrb[0].mxu0
    %v849 = vadd.f32 %v808, %v848
    %v850 = vpop.f32.mrb[0].mxu0
    %v851 = vadd.f32 %v810, %v850
    %v852 = vpop.f32.mrb[0].mxu0
    %v853 = vpop.f32.mrb[0].mxu0
    %854 = vdwg.mxu0
    %v855 = vmax.f32 %v849, 0.0
    %v856 = vmax.f32 %v851, 0.0
    %v857 = vpack.c.bf16 %v855, %v855
    %v858 = vpack.c.bf16 %v856, %v856
    %v859 = vld [vmem:[%s3] sm:$0xf]
    %v860 = vld [vmem:[%s3 + $0x4] sm:$0xf]
    %v861 = vld [vmem:[%s3 + $0x8] sm:$0xf]
    %v862 = vld [vmem:[%s3 + $0xc] sm:$0xf]
    %v863 = vld [vmem:[%s3 + $0x10] sm:$0xf]
    %v864 = vld [vmem:[%s3 + $0x14] sm:$0xf]
    %v865 = vld [vmem:[%s3 + $0x18] sm:$0xf]
    %v866 = vld [vmem:[%s3 + $0x1c] sm:$0xf]
    %v867 = vld [vmem:[%s3 + $0x20] sm:$0xf]
    %v868 = vld [vmem:[%s3 + $0x24] sm:$0xf]
    %v869 = vld [vmem:[%s3 + $0x28] sm:$0xf]
    %v870 = vld [vmem:[%s3 + $0x2c] sm:$0xf]
    %v871 = vld [vmem:[%s3 + $0x30] sm:$0xf]
    %v872 = vld [vmem:[%s3 + $0x34] sm:$0xf]
    %v873 = vld [vmem:[%s3 + $0x38] sm:$0xf]
    %v874 = vld [vmem:[%s3 + $0x3c] sm:$0xf]
    %v875 = vld [vmem:[%s3 + $0x40] sm:$0xf]
    %v876 = vld [vmem:[%s3 + $0x44] sm:$0xf]
    %v877 = vld [vmem:[%s3 + $0x48] sm:$0xf]
    %v878 = vld [vmem:[%s3 + $0x4c] sm:$0xf]
    %v879 = vld [vmem:[%s3 + $0x50] sm:$0xf]
    %v880 = vld [vmem:[%s3 + $0x54] sm:$0xf]
    %v881 = vld [vmem:[%s3 + $0x58] sm:$0xf]
    %v882 = vld [vmem:[%s3 + $0x5c] sm:$0xf]
    %v883 = vld [vmem:[%s3 + $0x60] sm:$0xf]
    %v884 = vld [vmem:[%s3 + $0x64] sm:$0xf]
    %v885 = vld [vmem:[%s3 + $0x68] sm:$0xf]
    %v886 = vld [vmem:[%s3 + $0x6c] sm:$0xf]
    %v887 = vld [vmem:[%s3 + $0x70] sm:$0xf]
    %v888 = vld [vmem:[%s3 + $0x74] sm:$0xf]
    %v889 = vld [vmem:[%s3 + $0x78] sm:$0xf]
    %v890 = vld [vmem:[%s3 + $0x7c] sm:$0xf]
    %v891 = vld [vmem:[%s4] sm:$0x1]
    %v893 = vlaneseq
    %v894 = vshrl.u32 %v893, 7
    %v895 = vsub.s32 0, %v894
    %v896 = vrot.slane %v891, %v895
    %v930 = vunpack.c.l.b16 %v859
    %v931 = vunpack.c.l.b16 %v860
    %v932 = vunpack.c.l.b16 %v861
    %v933 = vunpack.c.l.b16 %v862
    %v934 = vunpack.c.l.b16 %v863
    %v935 = vunpack.c.l.b16 %v864
    %v936 = vunpack.c.l.b16 %v865
    %v937 = vunpack.c.l.b16 %v866
    %v938 = vunpack.c.l.b16 %v867
    %v939 = vunpack.c.l.b16 %v868
    %v940 = vunpack.c.l.b16 %v869
    %v941 = vunpack.c.l.b16 %v870
    %v942 = vunpack.c.l.b16 %v871
    %v943 = vunpack.c.l.b16 %v872
    %v944 = vunpack.c.l.b16 %v873
    %v945 = vunpack.c.l.b16 %v874
    %v946 = vunpack.c.l.b16 %v875
    %v947 = vunpack.c.l.b16 %v876
    %v948 = vunpack.c.l.b16 %v877
    %v949 = vunpack.c.l.b16 %v878
    %v950 = vunpack.c.l.b16 %v879
    %v951 = vunpack.c.l.b16 %v880
    %v952 = vunpack.c.l.b16 %v881
    %v953 = vunpack.c.l.b16 %v882
    %v954 = vunpack.c.l.b16 %v883
    %v955 = vunpack.c.l.b16 %v884
    %v956 = vunpack.c.l.b16 %v885
    %v957 = vunpack.c.l.b16 %v886
    %v958 = vunpack.c.l.b16 %v887
    %v959 = vunpack.c.l.b16 %v888
    %v960 = vunpack.c.l.b16 %v889
    %v961 = vunpack.c.l.b16 %v890
    %v962 = vpack.c.b16 %v931, %v930
    %v963 = vpack.c.b16 %v933, %v932
    %v964 = vpack.c.b16 %v935, %v934
    %v965 = vpack.c.b16 %v937, %v936
    %v966 = vpack.c.b16 %v939, %v938
    %v967 = vpack.c.b16 %v941, %v940
    %v968 = vpack.c.b16 %v943, %v942
    %v969 = vpack.c.b16 %v945, %v944
    %v970 = vpack.c.b16 %v947, %v946
    %v971 = vpack.c.b16 %v949, %v948
    %v972 = vpack.c.b16 %v951, %v950
    %v973 = vpack.c.b16 %v953, %v952
    %v974 = vpack.c.b16 %v955, %v954
    %v975 = vpack.c.b16 %v957, %v956
    %v976 = vpack.c.b16 %v959, %v958
    %v977 = vpack.c.b16 %v961, %v960
    %994 = vmatprep.subr.bf16.mxu0 0
    %995 = vmatpush1.bf16.msra.mxu0 %v962
    %996 = vmatprep.subr.bf16.mxu0 0
    %997 = vmatpush1.bf16.msra.mxu0 %v963
    %998 = vmatprep.subr.bf16.mxu0 0
    %999 = vmatpush1.bf16.msra.mxu0 %v964
    %1000 = vmatprep.subr.bf16.mxu0 0
    %1001 = vmatpush1.bf16.msra.mxu0 %v965
    %1002 = vmatprep.subr.bf16.mxu0 0
    %1003 = vmatpush1.bf16.msra.mxu0 %v966
    %1004 = vmatprep.subr.bf16.mxu0 0
    %1005 = vmatpush1.bf16.msra.mxu0 %v967
    %1006 = vmatprep.subr.bf16.mxu0 0
    %1007 = vmatpush1.bf16.msra.mxu0 %v968
    %1008 = vmatprep.subr.bf16.mxu0 0
    %1009 = vmatpush1.bf16.msra.mxu0 %v969
    %1010 = vmatprep.subr.bf16.mxu0 0
    %1011 = vmatpush1.bf16.msra.mxu0 %v970
    %1012 = vmatprep.subr.bf16.mxu0 0
    %1013 = vmatpush1.bf16.msra.mxu0 %v971
    %1014 = vmatprep.subr.bf16.mxu0 0
    %1015 = vmatpush1.bf16.msra.mxu0 %v972
    %1016 = vmatprep.subr.bf16.mxu0 0
    %1017 = vmatpush1.bf16.msra.mxu0 %v973
    %1018 = vmatprep.subr.bf16.mxu0 0
    %1019 = vmatpush1.bf16.msra.mxu0 %v974
    %1020 = vmatprep.subr.bf16.mxu0 0
    %1021 = vmatpush1.bf16.msra.mxu0 %v975
    %1022 = vmatprep.subr.bf16.mxu0 0
    %1023 = vmatpush1.bf16.msra.mxu0 %v976
    %1024 = vmatprep.subr.bf16.mxu0 0
    %1025 = vmatpush1.bf16.msra.mxu0 %v977
    %1026 = vmatprep.mubr.bf16.mxu0 %v858
    %1027 = vmatmul.mubr.bf16.gmra.mrb[0].mxu0 %v857
    %v1028 = vpop.f32.mrb[0].mxu0
    %v1029 = vadd.f32 %v896, %v1028
    %v1030 = vpop.f32.mrb[0].mxu0
    %v1031 = vpop.f32.mrb[0].mxu0
    %v1032 = vpop.f32.mrb[0].mxu0
    %1033 = vdwg.mxu0
    %v1034 = vmax.f32 %v1029, 0.0
    %v1035 = vpack.c.bf16 %v1034, %v1034
    %v1036 = vld [vmem:[%s5] sm:$0xff]
    %v1037 = vld [vmem:[%s5 + $0x8] sm:$0xff]
    %v1038 = vld [vmem:[%s5 + $0x10] sm:$0xff]
    %v1039 = vld [vmem:[%s5 + $0x18] sm:$0xff]
    %v1040 = vld [vmem:[%s5 + $0x20] sm:$0xff]
    %v1041 = vld [vmem:[%s5 + $0x28] sm:$0xff]
    %v1042 = vld [vmem:[%s5 + $0x30] sm:$0xff]
    %v1043 = vld [vmem:[%s5 + $0x38] sm:$0xff]
    %v1044 = vld [vmem:[%s6] sm:$0x3]
    %v1046 = vlaneseq
    %v1047 = vshrl.u32 %v1046, 7
    %v1048 = vsub.s32 0, %v1047
    %v1049 = vrot.slane %v1044, %v1048
    %v1050 = vlaneseq
    %v1051 = vshrl.u32 %v1050, 7
    %v1052 = vsub.s32 1, %v1051
    %v1053 = vrot.slane %v1044, %v1052
    %v1064 = vunpack.c.l.b16 %v1036
    %v1065 = vunpack.c.h.b16 %v1036
    %v1066 = vunpack.c.l.b16 %v1037
    %v1067 = vunpack.c.h.b16 %v1037
    %v1068 = vunpack.c.l.b16 %v1038
    %v1069 = vunpack.c.h.b16 %v1038
    %v1070 = vunpack.c.l.b16 %v1039
    %v1071 = vunpack.c.h.b16 %v1039
    %v1072 = vunpack.c.l.b16 %v1040
    %v1073 = vunpack.c.h.b16 %v1040
    %v1074 = vunpack.c.l.b16 %v1041
    %v1075 = vunpack.c.h.b16 %v1041
    %v1076 = vunpack.c.l.b16 %v1042
    %v1077 = vunpack.c.h.b16 %v1042
    %v1078 = vunpack.c.l.b16 %v1043
    %v1079 = vunpack.c.h.b16 %v1043
    %v1080 = vpack.c.b16 %v1066, %v1064
    %v1081 = vpack.c.b16 %v1067, %v1065
    %v1082 = vpack.c.b16 %v1070, %v1068
    %v1083 = vpack.c.b16 %v1071, %v1069
    %v1084 = vpack.c.b16 %v1074, %v1072
    %v1085 = vpack.c.b16 %v1075, %v1073
    %v1086 = vpack.c.b16 %v1078, %v1076
    %v1087 = vpack.c.b16 %v1079, %v1077
    %vm1096 = vcmask 523264
    %v1098 = vsel %vm1096, %v1035, 0
    %1100 = vmatprep.subr.bf16.mxu0 %v1081
    %1101 = vmatpush1.bf16.msra.mxu0 %v1080
    %1102 = vmatprep.subr.bf16.mxu0 %v1083
    %1103 = vmatpush1.bf16.msra.mxu0 %v1082
    %1104 = vmatprep.subr.bf16.mxu0 %v1085
    %1105 = vmatpush1.bf16.msra.mxu0 %v1084
    %1106 = vmatprep.subr.bf16.mxu0 %v1087
    %1107 = vmatpush1.bf16.msra.mxu0 %v1086
    %1108 = vmatprep.subr.bf16.mxu0 0
    %1109 = vmatpush1.bf16.msra.mxu0 0
    %1110 = vmatprep.subr.bf16.mxu0 0
    %1111 = vmatpush1.bf16.msra.mxu0 0
    %1112 = vmatprep.subr.bf16.mxu0 0
    %1113 = vmatpush1.bf16.msra.mxu0 0
    %1114 = vmatprep.subr.bf16.mxu0 0
    %1115 = vmatpush1.bf16.msra.mxu0 0
    %1116 = vmatprep.subr.bf16.mxu0 0
    %1117 = vmatpush1.bf16.msra.mxu0 0
    %1118 = vmatprep.subr.bf16.mxu0 0
    %1119 = vmatpush1.bf16.msra.mxu0 0
    %1120 = vmatprep.subr.bf16.mxu0 0
    %1121 = vmatpush1.bf16.msra.mxu0 0
    %1122 = vmatprep.subr.bf16.mxu0 0
    %1123 = vmatpush1.bf16.msra.mxu0 0
    %1124 = vmatprep.subr.bf16.mxu0 0
    %1125 = vmatpush1.bf16.msra.mxu0 0
    %1126 = vmatprep.subr.bf16.mxu0 0
    %1127 = vmatpush1.bf16.msra.mxu0 0
    %1128 = vmatprep.subr.bf16.mxu0 0
    %1129 = vmatpush1.bf16.msra.mxu0 0
    %1130 = vmatprep.subr.bf16.mxu0 0
    %1131 = vmatpush1.bf16.msra.mxu0 0
    %1132 = vmatprep.mubr.bf16.mxu0 0
    %1133 = vmatmul.mubr.bf16.gmra.mrb[0].mxu0 %v1098
    %v1134 = vpop.f32.mrb[0].mxu0
    %v1135 = vadd.f32 %v1049, %v1134
    %v1136 = vpop.f32.mrb[0].mxu0
    %v1137 = vadd.f32 %v1053, %v1136
    %v1138 = vpop.f32.mrb[0].mxu0
    %v1139 = vpop.f32.mrb[0].mxu0
    %1140 = vdwg.mxu0
    %v1141 = vtanh.pop %v1135
    %v1142 = vtanh.pop %v1137
    %v1143 = vpack.c.bf16 %v1141, %v1141
    %v1144 = vpack.c.bf16 %v1142, %v1142
    %v1145 = vld [vmem:[%s7] sm:$0xff]
    %v1146 = vld [vmem:[%s7 + $0x8] sm:$0xff]
    %v1147 = vld [vmem:[%s7 + $0x10] sm:$0xff]
    %v1148 = vld [vmem:[%s7 + $0x18] sm:$0xf]
    %v1149 = vld [vmem:[%s7 + $0x1c] sm:$0xff]
    %v1150 = vld [vmem:[%s7 + $0x24] sm:$0xff]
    %v1151 = vld [vmem:[%s7 + $0x2c] sm:$0xff]
    %v1152 = vld [vmem:[%s7 + $0x34] sm:$0xf]
    %v1153 = vld [vmem:[%s7 + $0x38] sm:$0xff]
    %v1154 = vld [vmem:[%s7 + $0x40] sm:$0xff]
    %v1155 = vld [vmem:[%s7 + $0x48] sm:$0xff]
    %v1156 = vld [vmem:[%s7 + $0x50] sm:$0xf]
    %v1157 = vld [vmem:[%s7 + $0x54] sm:$0xff]
    %v1158 = vld [vmem:[%s7 + $0x5c] sm:$0xff]
    %v1159 = vld [vmem:[%s7 + $0x64] sm:$0xff]
    %v1160 = vld [vmem:[%s7 + $0x6c] sm:$0xf]
    %v1161 = vld [vmem:[%s7 + $0x70] sm:$0xff]
    %v1162 = vld [vmem:[%s7 + $0x78] sm:$0xff]
    %v1163 = vld [vmem:[%s7 + $0x80] sm:$0xff]
    %v1164 = vld [vmem:[%s7 + $0x88] sm:$0xf]
    %v1165 = vld [vmem:[%s7 + $0x8c] sm:$0xff]
    %v1166 = vld [vmem:[%s7 + $0x94] sm:$0xff]
    %v1167 = vld [vmem:[%s7 + $0x9c] sm:$0xff]
    %v1168 = vld [vmem:[%s7 + $0xa4] sm:$0xf]
    %v1169 = vld [vmem:[%s7 + $0xa8] sm:$0xff]
    %v1170 = vld [vmem:[%s7 + $0xb0] sm:$0xff]
    %v1171 = vld [vmem:[%s7 + $0xb8] sm:$0xff]
    %v1172 = vld [vmem:[%s7 + $0xc0] sm:$0xf]
    %v1173 = vld [vmem:[%s7 + $0xc4] sm:$0xff]
    %v1174 = vld [vmem:[%s7 + $0xcc] sm:$0xff]
    %v1175 = vld [vmem:[%s7 + $0xd4] sm:$0xff]
    %v1176 = vld [vmem:[%s7 + $0xdc] sm:$0xf]
    %v1177 = vld [vmem:[%s7 + $0xe0] sm:$0xff]
    %v1178 = vld [vmem:[%s7 + $0xe8] sm:$0xff]
    %v1179 = vld [vmem:[%s7 + $0xf0] sm:$0xff]
    %v1180 = vld [vmem:[%s7 + $0xf8] sm:$0xf]
    %v1181 = vld [vmem:[%s7 + $0xfc] sm:$0xff]
    %v1182 = vld [vmem:[%s7 + $0x104] sm:$0xff]
    %v1183 = vld [vmem:[%s7 + $0x10c] sm:$0xff]
    %v1184 = vld [vmem:[%s7 + $0x114] sm:$0xf]
    %v1185 = vld [vmem:[%s7 + $0x118] sm:$0xff]
    %v1186 = vld [vmem:[%s7 + $0x120] sm:$0xff]
    %v1187 = vld [vmem:[%s7 + $0x128] sm:$0xff]
    %v1188 = vld [vmem:[%s7 + $0x130] sm:$0xf]
    %v1189 = vld [vmem:[%s7 + $0x134] sm:$0xff]
    %v1190 = vld [vmem:[%s7 + $0x13c] sm:$0xff]
    %v1191 = vld [vmem:[%s7 + $0x144] sm:$0xff]
    %v1192 = vld [vmem:[%s7 + $0x14c] sm:$0xf]
    %v1193 = vld [vmem:[%s7 + $0x150] sm:$0xff]
    %v1194 = vld [vmem:[%s7 + $0x158] sm:$0xff]
    %v1195 = vld [vmem:[%s7 + $0x160] sm:$0xff]
    %v1196 = vld [vmem:[%s7 + $0x168] sm:$0xf]
    %v1197 = vld [vmem:[%s7 + $0x16c] sm:$0xff]
    %v1198 = vld [vmem:[%s7 + $0x174] sm:$0xff]
    %v1199 = vld [vmem:[%s7 + $0x17c] sm:$0xff]
    %v1200 = vld [vmem:[%s7 + $0x184] sm:$0xf]
    %v1201 = vld [vmem:[%s7 + $0x188] sm:$0xff]
    %v1202 = vld [vmem:[%s7 + $0x190] sm:$0xff]
    %v1203 = vld [vmem:[%s7 + $0x198] sm:$0xff]
    %v1204 = vld [vmem:[%s7 + $0x1a0] sm:$0xf]
    %v1205 = vld [vmem:[%s7 + $0x1a4] sm:$0xff]
    %v1206 = vld [vmem:[%s7 + $0x1ac] sm:$0xff]
    %v1207 = vld [vmem:[%s7 + $0x1b4] sm:$0xff]
    %v1208 = vld [vmem:[%s7 + $0x1bc] sm:$0xf]
    %v1209 = vld [vmem:[%s7 + $0x1c0] sm:$0xff]
    %v1210 = vld [vmem:[%s7 + $0x1c8] sm:$0xff]
    %v1211 = vld [vmem:[%s7 + $0x1d0] sm:$0xff]
    %v1212 = vld [vmem:[%s7 + $0x1d8] sm:$0xf]
    %v1213 = vld [vmem:[%s7 + $0x1dc] sm:$0xff]
    %v1214 = vld [vmem:[%s7 + $0x1e4] sm:$0xff]
    %v1215 = vld [vmem:[%s7 + $0x1ec] sm:$0xff]
    %v1216 = vld [vmem:[%s7 + $0x1f4] sm:$0xf]
    %v1217 = vld [vmem:[%s7 + $0x1f8] sm:$0xff]
    %v1218 = vld [vmem:[%s7 + $0x200] sm:$0xff]
    %v1219 = vld [vmem:[%s7 + $0x208] sm:$0xff]
    %v1220 = vld [vmem:[%s7 + $0x210] sm:$0xf]
    %v1221 = vld [vmem:[%s7 + $0x214] sm:$0xff]
    %v1222 = vld [vmem:[%s7 + $0x21c] sm:$0xff]
    %v1223 = vld [vmem:[%s7 + $0x224] sm:$0xff]
    %v1224 = vld [vmem:[%s7 + $0x22c] sm:$0xf]
    %v1225 = vld [vmem:[%s7 + $0x230] sm:$0xff]
    %v1226 = vld [vmem:[%s7 + $0x238] sm:$0xff]
    %v1227 = vld [vmem:[%s7 + $0x240] sm:$0xff]
    %v1228 = vld [vmem:[%s7 + $0x248] sm:$0xf]
    %v1229 = vld [vmem:[%s7 + $0x24c] sm:$0xff]
    %v1230 = vld [vmem:[%s7 + $0x254] sm:$0xff]
    %v1231 = vld [vmem:[%s7 + $0x25c] sm:$0xff]
    %v1232 = vld [vmem:[%s7 + $0x264] sm:$0xf]
    %v1233 = vld [vmem:[%s7 + $0x268] sm:$0xff]
    %v1234 = vld [vmem:[%s7 + $0x270] sm:$0xff]
    %v1235 = vld [vmem:[%s7 + $0x278] sm:$0xff]
    %v1236 = vld [vmem:[%s7 + $0x280] sm:$0xf]
    %v1237 = vld [vmem:[%s7 + $0x284] sm:$0xff]
    %v1238 = vld [vmem:[%s7 + $0x28c] sm:$0xff]
    %v1239 = vld [vmem:[%s7 + $0x294] sm:$0xff]
    %v1240 = vld [vmem:[%s7 + $0x29c] sm:$0xf]
    %v1241 = vld [vmem:[%s7 + $0x2a0] sm:$0xff]
    %v1242 = vld [vmem:[%s7 + $0x2a8] sm:$0xff]
    %v1243 = vld [vmem:[%s7 + $0x2b0] sm:$0xff]
    %v1244 = vld [vmem:[%s7 + $0x2b8] sm:$0xf]
    %v1245 = vld [vmem:[%s7 + $0x2bc] sm:$0xff]
    %v1246 = vld [vmem:[%s7 + $0x2c4] sm:$0xff]
    %v1247 = vld [vmem:[%s7 + $0x2cc] sm:$0xff]
    %v1248 = vld [vmem:[%s7 + $0x2d4] sm:$0xf]
    %v1249 = vld [vmem:[%s7 + $0x2d8] sm:$0xff]
    %v1250 = vld [vmem:[%s7 + $0x2e0] sm:$0xff]
    %v1251 = vld [vmem:[%s7 + $0x2e8] sm:$0xff]
    %v1252 = vld [vmem:[%s7 + $0x2f0] sm:$0xf]
    %v1253 = vld [vmem:[%s7 + $0x2f4] sm:$0xff]
    %v1254 = vld [vmem:[%s7 + $0x2fc] sm:$0xff]
    %v1255 = vld [vmem:[%s7 + $0x304] sm:$0xff]
    %v1256 = vld [vmem:[%s7 + $0x30c] sm:$0xf]
    %v1257 = vld [vmem:[%s7 + $0x310] sm:$0xff]
    %v1258 = vld [vmem:[%s7 + $0x318] sm:$0xff]
    %v1259 = vld [vmem:[%s7 + $0x320] sm:$0xff]
    %v1260 = vld [vmem:[%s7 + $0x328] sm:$0xf]
    %v1261 = vld [vmem:[%s7 + $0x32c] sm:$0xff]
    %v1262 = vld [vmem:[%s7 + $0x334] sm:$0xff]
    %v1263 = vld [vmem:[%s7 + $0x33c] sm:$0xff]
    %v1264 = vld [vmem:[%s7 + $0x344] sm:$0xf]
    %v1265 = vld [vmem:[%s7 + $0x348] sm:$0xff]
    %v1266 = vld [vmem:[%s7 + $0x350] sm:$0xff]
    %v1267 = vld [vmem:[%s7 + $0x358] sm:$0xff]
    %v1268 = vld [vmem:[%s7 + $0x360] sm:$0xf]
    %v1269 = vld [vmem:[%s7 + $0x364] sm:$0xff]
    %v1270 = vld [vmem:[%s7 + $0x36c] sm:$0xff]
    %v1271 = vld [vmem:[%s7 + $0x374] sm:$0xff]
    %v1272 = vld [vmem:[%s7 + $0x37c] sm:$0xf]
    %v1273 = vld [vmem:[%s8] sm:$0x7f]
    %v1275 = vlaneseq
    %v1276 = vshrl.u32 %v1275, 7
    %v1277 = vsub.s32 0, %v1276
    %v1278 = vrot.slane %v1273, %v1277
    %v1279 = vlaneseq
    %v1280 = vshrl.u32 %v1279, 7
    %v1281 = vsub.s32 1, %v1280
    %v1282 = vrot.slane %v1273, %v1281
    %v1283 = vlaneseq
    %v1284 = vshrl.u32 %v1283, 7
    %v1285 = vsub.s32 2, %v1284
    %v1286 = vrot.slane %v1273, %v1285
    %v1287 = vlaneseq
    %v1288 = vshrl.u32 %v1287, 7
    %v1289 = vsub.s32 3, %v1288
    %v1290 = vrot.slane %v1273, %v1289
    %v1291 = vlaneseq
    %v1292 = vshrl.u32 %v1291, 7
    %v1293 = vsub.s32 4, %v1292
    %v1294 = vrot.slane %v1273, %v1293
    %v1295 = vlaneseq
    %v1296 = vshrl.u32 %v1295, 7
    %v1297 = vsub.s32 5, %v1296
    %v1298 = vrot.slane %v1273, %v1297
    %v1299 = vlaneseq
    %v1300 = vshrl.u32 %v1299, 7
    %v1301 = vsub.s32 6, %v1300
    %v1302 = vrot.slane %v1273, %v1301
    %v1438 = vunpack.c.l.b16 %v1145
    %v1439 = vunpack.c.h.b16 %v1145
    %v1440 = vunpack.c.l.b16 %v1146
    %v1441 = vunpack.c.h.b16 %v1146
    %v1442 = vunpack.c.l.b16 %v1147
    %v1443 = vunpack.c.h.b16 %v1147
    %v1444 = vunpack.c.l.b16 %v1148
    %v1445 = vunpack.c.l.b16 %v1149
    %v1446 = vunpack.c.h.b16 %v1149
    %v1447 = vunpack.c.l.b16 %v1150
    %v1448 = vunpack.c.h.b16 %v1150
    %v1449 = vunpack.c.l.b16 %v1151
    %v1450 = vunpack.c.h.b16 %v1151
    %v1451 = vunpack.c.l.b16 %v1152
    %v1452 = vunpack.c.l.b16 %v1153
    %v1453 = vunpack.c.h.b16 %v1153
    %v1454 = vunpack.c.l.b16 %v1154
    %v1455 = vunpack.c.h.b16 %v1154
    %v1456 = vunpack.c.l.b16 %v1155
    %v1457 = vunpack.c.h.b16 %v1155
    %v1458 = vunpack.c.l.b16 %v1156
    %v1459 = vunpack.c.l.b16 %v1157
    %v1460 = vunpack.c.h.b16 %v1157
    %v1461 = vunpack.c.l.b16 %v1158
    %v1462 = vunpack.c.h.b16 %v1158
    %v1463 = vunpack.c.l.b16 %v1159
    %v1464 = vunpack.c.h.b16 %v1159
    %v1465 = vunpack.c.l.b16 %v1160
    %v1466 = vunpack.c.l.b16 %v1161
    %v1467 = vunpack.c.h.b16 %v1161
    %v1468 = vunpack.c.l.b16 %v1162
    %v1469 = vunpack.c.h.b16 %v1162
    %v1470 = vunpack.c.l.b16 %v1163
    %v1471 = vunpack.c.h.b16 %v1163
    %v1472 = vunpack.c.l.b16 %v1164
    %v1473 = vunpack.c.l.b16 %v1165
    %v1474 = vunpack.c.h.b16 %v1165
    %v1475 = vunpack.c.l.b16 %v1166
    %v1476 = vunpack.c.h.b16 %v1166
    %v1477 = vunpack.c.l.b16 %v1167
    %v1478 = vunpack.c.h.b16 %v1167
    %v1479 = vunpack.c.l.b16 %v1168
    %v1480 = vunpack.c.l.b16 %v1169
    %v1481 = vunpack.c.h.b16 %v1169
    %v1482 = vunpack.c.l.b16 %v1170
    %v1483 = vunpack.c.h.b16 %v1170
    %v1484 = vunpack.c.l.b16 %v1171
    %v1485 = vunpack.c.h.b16 %v1171
    %v1486 = vunpack.c.l.b16 %v1172
    %v1487 = vunpack.c.l.b16 %v1173
    %v1488 = vunpack.c.h.b16 %v1173
    %v1489 = vunpack.c.l.b16 %v1174
    %v1490 = vunpack.c.h.b16 %v1174
    %v1491 = vunpack.c.l.b16 %v1175
    %v1492 = vunpack.c.h.b16 %v1175
    %v1493 = vunpack.c.l.b16 %v1176
    %v1494 = vunpack.c.l.b16 %v1177
    %v1495 = vunpack.c.h.b16 %v1177
    %v1496 = vunpack.c.l.b16 %v1178
    %v1497 = vunpack.c.h.b16 %v1178
    %v1498 = vunpack.c.l.b16 %v1179
    %v1499 = vunpack.c.h.b16 %v1179
    %v1500 = vunpack.c.l.b16 %v1180
    %v1501 = vunpack.c.l.b16 %v1181
    %v1502 = vunpack.c.h.b16 %v1181
    %v1503 = vunpack.c.l.b16 %v1182
    %v1504 = vunpack.c.h.b16 %v1182
    %v1505 = vunpack.c.l.b16 %v1183
    %v1506 = vunpack.c.h.b16 %v1183
    %v1507 = vunpack.c.l.b16 %v1184
    %v1508 = vunpack.c.l.b16 %v1185
    %v1509 = vunpack.c.h.b16 %v1185
    %v1510 = vunpack.c.l.b16 %v1186
    %v1511 = vunpack.c.h.b16 %v1186
    %v1512 = vunpack.c.l.b16 %v1187
    %v1513 = vunpack.c.h.b16 %v1187
    %v1514 = vunpack.c.l.b16 %v1188
    %v1515 = vunpack.c.l.b16 %v1189
    %v1516 = vunpack.c.h.b16 %v1189
    %v1517 = vunpack.c.l.b16 %v1190
    %v1518 = vunpack.c.h.b16 %v1190
    %v1519 = vunpack.c.l.b16 %v1191
    %v1520 = vunpack.c.h.b16 %v1191
    %v1521 = vunpack.c.l.b16 %v1192
    %v1522 = vunpack.c.l.b16 %v1193
    %v1523 = vunpack.c.h.b16 %v1193
    %v1524 = vunpack.c.l.b16 %v1194
    %v1525 = vunpack.c.h.b16 %v1194
    %v1526 = vunpack.c.l.b16 %v1195
    %v1527 = vunpack.c.h.b16 %v1195
    %v1528 = vunpack.c.l.b16 %v1196
    %v1529 = vunpack.c.l.b16 %v1197
    %v1530 = vunpack.c.h.b16 %v1197
    %v1531 = vunpack.c.l.b16 %v1198
    %v1532 = vunpack.c.h.b16 %v1198
    %v1533 = vunpack.c.l.b16 %v1199
    %v1534 = vunpack.c.h.b16 %v1199
    %v1535 = vunpack.c.l.b16 %v1200
    %v1536 = vunpack.c.l.b16 %v1201
    %v1537 = vunpack.c.h.b16 %v1201
    %v1538 = vunpack.c.l.b16 %v1202
    %v1539 = vunpack.c.h.b16 %v1202
    %v1540 = vunpack.c.l.b16 %v1203
    %v1541 = vunpack.c.h.b16 %v1203
    %v1542 = vunpack.c.l.b16 %v1204
    %v1543 = vunpack.c.l.b16 %v1205
    %v1544 = vunpack.c.h.b16 %v1205
    %v1545 = vunpack.c.l.b16 %v1206
    %v1546 = vunpack.c.h.b16 %v1206
    %v1547 = vunpack.c.l.b16 %v1207
    %v1548 = vunpack.c.h.b16 %v1207
    %v1549 = vunpack.c.l.b16 %v1208
    %v1550 = vunpack.c.l.b16 %v1209
    %v1551 = vunpack.c.h.b16 %v1209
    %v1552 = vunpack.c.l.b16 %v1210
    %v1553 = vunpack.c.h.b16 %v1210
    %v1554 = vunpack.c.l.b16 %v1211
    %v1555 = vunpack.c.h.b16 %v1211
    %v1556 = vunpack.c.l.b16 %v1212
    %v1557 = vunpack.c.l.b16 %v1213
    %v1558 = vunpack.c.h.b16 %v1213
    %v1559 = vunpack.c.l.b16 %v1214
    %v1560 = vunpack.c.h.b16 %v1214
    %v1561 = vunpack.c.l.b16 %v1215
    %v1562 = vunpack.c.h.b16 %v1215
    %v1563 = vunpack.c.l.b16 %v1216
    %v1564 = vunpack.c.l.b16 %v1217
    %v1565 = vunpack.c.h.b16 %v1217
    %v1566 = vunpack.c.l.b16 %v1218
    %v1567 = vunpack.c.h.b16 %v1218
    %v1568 = vunpack.c.l.b16 %v1219
    %v1569 = vunpack.c.h.b16 %v1219
    %v1570 = vunpack.c.l.b16 %v1220
    %v1571 = vunpack.c.l.b16 %v1221
    %v1572 = vunpack.c.h.b16 %v1221
    %v1573 = vunpack.c.l.b16 %v1222
    %v1574 = vunpack.c.h.b16 %v1222
    %v1575 = vunpack.c.l.b16 %v1223
    %v1576 = vunpack.c.h.b16 %v1223
    %v1577 = vunpack.c.l.b16 %v1224
    %v1578 = vunpack.c.l.b16 %v1225
    %v1579 = vunpack.c.h.b16 %v1225
    %v1580 = vunpack.c.l.b16 %v1226
    %v1581 = vunpack.c.h.b16 %v1226
    %v1582 = vunpack.c.l.b16 %v1227
    %v1583 = vunpack.c.h.b16 %v1227
    %v1584 = vunpack.c.l.b16 %v1228
    %v1585 = vunpack.c.l.b16 %v1229
    %v1586 = vunpack.c.h.b16 %v1229
    %v1587 = vunpack.c.l.b16 %v1230
    %v1588 = vunpack.c.h.b16 %v1230
    %v1589 = vunpack.c.l.b16 %v1231
    %v1590 = vunpack.c.h.b16 %v1231
    %v1591 = vunpack.c.l.b16 %v1232
    %v1592 = vunpack.c.l.b16 %v1233
    %v1593 = vunpack.c.h.b16 %v1233
    %v1594 = vunpack.c.l.b16 %v1234
    %v1595 = vunpack.c.h.b16 %v1234
    %v1596 = vunpack.c.l.b16 %v1235
    %v1597 = vunpack.c.h.b16 %v1235
    %v1598 = vunpack.c.l.b16 %v1236
    %v1599 = vunpack.c.l.b16 %v1237
    %v1600 = vunpack.c.h.b16 %v1237
    %v1601 = vunpack.c.l.b16 %v1238
    %v1602 = vunpack.c.h.b16 %v1238
    %v1603 = vunpack.c.l.b16 %v1239
    %v1604 = vunpack.c.h.b16 %v1239
    %v1605 = vunpack.c.l.b16 %v1240
    %v1606 = vunpack.c.l.b16 %v1241
    %v1607 = vunpack.c.h.b16 %v1241
    %v1608 = vunpack.c.l.b16 %v1242
    %v1609 = vunpack.c.h.b16 %v1242
    %v1610 = vunpack.c.l.b16 %v1243
    %v1611 = vunpack.c.h.b16 %v1243
    %v1612 = vunpack.c.l.b16 %v1244
    %v1613 = vunpack.c.l.b16 %v1245
    %v1614 = vunpack.c.h.b16 %v1245
    %v1615 = vunpack.c.l.b16 %v1246
    %v1616 = vunpack.c.h.b16 %v1246
    %v1617 = vunpack.c.l.b16 %v1247
    %v1618 = vunpack.c.h.b16 %v1247
    %v1619 = vunpack.c.l.b16 %v1248
    %v1620 = vunpack.c.l.b16 %v1249
    %v1621 = vunpack.c.h.b16 %v1249
    %v1622 = vunpack.c.l.b16 %v1250
    %v1623 = vunpack.c.h.b16 %v1250
    %v1624 = vunpack.c.l.b16 %v1251
    %v1625 = vunpack.c.h.b16 %v1251
    %v1626 = vunpack.c.l.b16 %v1252
    %v1627 = vunpack.c.l.b16 %v1253
    %v1628 = vunpack.c.h.b16 %v1253
    %v1629 = vunpack.c.l.b16 %v1254
    %v1630 = vunpack.c.h.b16 %v1254
    %v1631 = vunpack.c.l.b16 %v1255
    %v1632 = vunpack.c.h.b16 %v1255
    %v1633 = vunpack.c.l.b16 %v1256
    %v1634 = vunpack.c.l.b16 %v1257
    %v1635 = vunpack.c.h.b16 %v1257
    %v1636 = vunpack.c.l.b16 %v1258
    %v1637 = vunpack.c.h.b16 %v1258
    %v1638 = vunpack.c.l.b16 %v1259
    %v1639 = vunpack.c.h.b16 %v1259
    %v1640 = vunpack.c.l.b16 %v1260
    %v1641 = vunpack.c.l.b16 %v1261
    %v1642 = vunpack.c.h.b16 %v1261
    %v1643 = vunpack.c.l.b16 %v1262
    %v1644 = vunpack.c.h.b16 %v1262
    %v1645 = vunpack.c.l.b16 %v1263
    %v1646 = vunpack.c.h.b16 %v1263
    %v1647 = vunpack.c.l.b16 %v1264
    %v1648 = vunpack.c.l.b16 %v1265
    %v1649 = vunpack.c.h.b16 %v1265
    %v1650 = vunpack.c.l.b16 %v1266
    %v1651 = vunpack.c.h.b16 %v1266
    %v1652 = vunpack.c.l.b16 %v1267
    %v1653 = vunpack.c.h.b16 %v1267
    %v1654 = vunpack.c.l.b16 %v1268
    %v1655 = vunpack.c.l.b16 %v1269
    %v1656 = vunpack.c.h.b16 %v1269
    %v1657 = vunpack.c.l.b16 %v1270
    %v1658 = vunpack.c.h.b16 %v1270
    %v1659 = vunpack.c.l.b16 %v1271
    %v1660 = vunpack.c.h.b16 %v1271
    %v1661 = vunpack.c.l.b16 %v1272
    %v1662 = vpack.c.b16 %v1445, %v1438
    %v1663 = vpack.c.b16 %v1446, %v1439
    %v1664 = vpack.c.b16 %v1447, %v1440
    %v1665 = vpack.c.b16 %v1448, %v1441
    %v1666 = vpack.c.b16 %v1449, %v1442
    %v1667 = vpack.c.b16 %v1450, %v1443
    %v1668 = vpack.c.b16 %v1451, %v1444
    %v1669 = vpack.c.b16 %v1459, %v1452
    %v1670 = vpack.c.b16 %v1460, %v1453
    %v1671 = vpack.c.b16 %v1461, %v1454
    %v1672 = vpack.c.b16 %v1462, %v1455
    %v1673 = vpack.c.b16 %v1463, %v1456
    %v1674 = vpack.c.b16 %v1464, %v1457
    %v1675 = vpack.c.b16 %v1465, %v1458
    %v1676 = vpack.c.b16 %v1473, %v1466
    %v1677 = vpack.c.b16 %v1474, %v1467
    %v1678 = vpack.c.b16 %v1475, %v1468
    %v1679 = vpack.c.b16 %v1476, %v1469
    %v1680 = vpack.c.b16 %v1477, %v1470
    %v1681 = vpack.c.b16 %v1478, %v1471
    %v1682 = vpack.c.b16 %v1479, %v1472
    %v1683 = vpack.c.b16 %v1487, %v1480
    %v1684 = vpack.c.b16 %v1488, %v1481
    %v1685 = vpack.c.b16 %v1489, %v1482
    %v1686 = vpack.c.b16 %v1490, %v1483
    %v1687 = vpack.c.b16 %v1491, %v1484
    %v1688 = vpack.c.b16 %v1492, %v1485
    %v1689 = vpack.c.b16 %v1493, %v1486
    %v1690 = vpack.c.b16 %v1501, %v1494
    %v1691 = vpack.c.b16 %v1502, %v1495
    %v1692 = vpack.c.b16 %v1503, %v1496
    %v1693 = vpack.c.b16 %v1504, %v1497
    %v1694 = vpack.c.b16 %v1505, %v1498
    %v1695 = vpack.c.b16 %v1506, %v1499
    %v1696 = vpack.c.b16 %v1507, %v1500
    %v1697 = vpack.c.b16 %v1515, %v1508
    %v1698 = vpack.c.b16 %v1516, %v1509
    %v1699 = vpack.c.b16 %v1517, %v1510
    %v1700 = vpack.c.b16 %v1518, %v1511
    %v1701 = vpack.c.b16 %v1519, %v1512
    %v1702 = vpack.c.b16 %v1520, %v1513
    %v1703 = vpack.c.b16 %v1521, %v1514
    %v1704 = vpack.c.b16 %v1529, %v1522
    %v1705 = vpack.c.b16 %v1530, %v1523
    %v1706 = vpack.c.b16 %v1531, %v1524
    %v1707 = vpack.c.b16 %v1532, %v1525
    %v1708 = vpack.c.b16 %v1533, %v1526
    %v1709 = vpack.c.b16 %v1534, %v1527
    %v1710 = vpack.c.b16 %v1535, %v1528
    %v1711 = vpack.c.b16 %v1543, %v1536
    %v1712 = vpack.c.b16 %v1544, %v1537
    %v1713 = vpack.c.b16 %v1545, %v1538
    %v1714 = vpack.c.b16 %v1546, %v1539
    %v1715 = vpack.c.b16 %v1547, %v1540
    %v1716 = vpack.c.b16 %v1548, %v1541
    %v1717 = vpack.c.b16 %v1549, %v1542
    %v1718 = vpack.c.b16 %v1557, %v1550
    %v1719 = vpack.c.b16 %v1558, %v1551
    %v1720 = vpack.c.b16 %v1559, %v1552
    %v1721 = vpack.c.b16 %v1560, %v1553
    %v1722 = vpack.c.b16 %v1561, %v1554
    %v1723 = vpack.c.b16 %v1562, %v1555
    %v1724 = vpack.c.b16 %v1563, %v1556
    %v1725 = vpack.c.b16 %v1571, %v1564
    %v1726 = vpack.c.b16 %v1572, %v1565
    %v1727 = vpack.c.b16 %v1573, %v1566
    %v1728 = vpack.c.b16 %v1574, %v1567
    %v1729 = vpack.c.b16 %v1575, %v1568
    %v1730 = vpack.c.b16 %v1576, %v1569
    %v1731 = vpack.c.b16 %v1577, %v1570
    %v1732 = vpack.c.b16 %v1585, %v1578
    %v1733 = vpack.c.b16 %v1586, %v1579
    %v1734 = vpack.c.b16 %v1587, %v1580
    %v1735 = vpack.c.b16 %v1588, %v1581
    %v1736 = vpack.c.b16 %v1589, %v1582
    %v1737 = vpack.c.b16 %v1590, %v1583
    %v1738 = vpack.c.b16 %v1591, %v1584
    %v1739 = vpack.c.b16 %v1599, %v1592
    %v1740 = vpack.c.b16 %v1600, %v1593
    %v1741 = vpack.c.b16 %v1601, %v1594
    %v1742 = vpack.c.b16 %v1602, %v1595
    %v1743 = vpack.c.b16 %v1603, %v1596
    %v1744 = vpack.c.b16 %v1604, %v1597
    %v1745 = vpack.c.b16 %v1605, %v1598
    %v1746 = vpack.c.b16 %v1613, %v1606
    %v1747 = vpack.c.b16 %v1614, %v1607
    %v1748 = vpack.c.b16 %v1615, %v1608
    %v1749 = vpack.c.b16 %v1616, %v1609
    %v1750 = vpack.c.b16 %v1617, %v1610
    %v1751 = vpack.c.b16 %v1618, %v1611
    %v1752 = vpack.c.b16 %v1619, %v1612
    %v1753 = vpack.c.b16 %v1627, %v1620
    %v1754 = vpack.c.b16 %v1628, %v1621
    %v1755 = vpack.c.b16 %v1629, %v1622
    %v1756 = vpack.c.b16 %v1630, %v1623
    %v1757 = vpack.c.b16 %v1631, %v1624
    %v1758 = vpack.c.b16 %v1632, %v1625
    %v1759 = vpack.c.b16 %v1633, %v1626
    %v1760 = vpack.c.b16 %v1641, %v1634
    %v1761 = vpack.c.b16 %v1642, %v1635
    %v1762 = vpack.c.b16 %v1643, %v1636
    %v1763 = vpack.c.b16 %v1644, %v1637
    %v1764 = vpack.c.b16 %v1645, %v1638
    %v1765 = vpack.c.b16 %v1646, %v1639
    %v1766 = vpack.c.b16 %v1647, %v1640
    %v1767 = vpack.c.b16 %v1655, %v1648
    %v1768 = vpack.c.b16 %v1656, %v1649
    %v1769 = vpack.c.b16 %v1657, %v1650
    %v1770 = vpack.c.b16 %v1658, %v1651
    %v1771 = vpack.c.b16 %v1659, %v1652
    %v1772 = vpack.c.b16 %v1660, %v1653
    %v1773 = vpack.c.b16 %v1661, %v1654
    %1886 = vmatprep.subr.bf16.mxu0 %v1663
    %1887 = vmatpush1.bf16.msra.mxu0 %v1662
    %1888 = vmatprep.subr.bf16.mxu0 %v1670
    %1889 = vmatpush1.bf16.msra.mxu0 %v1669
    %1890 = vmatprep.subr.bf16.mxu0 %v1677
    %1891 = vmatpush1.bf16.msra.mxu0 %v1676
    %1892 = vmatprep.subr.bf16.mxu0 %v1684
    %1893 = vmatpush1.bf16.msra.mxu0 %v1683
    %1894 = vmatprep.subr.bf16.mxu0 %v1691
    %1895 = vmatpush1.bf16.msra.mxu0 %v1690
    %1896 = vmatprep.subr.bf16.mxu0 %v1698
    %1897 = vmatpush1.bf16.msra.mxu0 %v1697
    %1898 = vmatprep.subr.bf16.mxu0 %v1705
    %1899 = vmatpush1.bf16.msra.mxu0 %v1704
    %1900 = vmatprep.subr.bf16.mxu0 %v1712
    %1901 = vmatpush1.bf16.msra.mxu0 %v1711
    %1902 = vmatprep.subr.bf16.mxu0 %v1719
    %1903 = vmatpush1.bf16.msra.mxu0 %v1718
    %1904 = vmatprep.subr.bf16.mxu0 %v1726
    %1905 = vmatpush1.bf16.msra.mxu0 %v1725
    %1906 = vmatprep.subr.bf16.mxu0 %v1733
    %1907 = vmatpush1.bf16.msra.mxu0 %v1732
    %1908 = vmatprep.subr.bf16.mxu0 %v1740
    %1909 = vmatpush1.bf16.msra.mxu0 %v1739
    %1910 = vmatprep.subr.bf16.mxu0 %v1747
    %1911 = vmatpush1.bf16.msra.mxu0 %v1746
    %1912 = vmatprep.subr.bf16.mxu0 %v1754
    %1913 = vmatpush1.bf16.msra.mxu0 %v1753
    %1914 = vmatprep.subr.bf16.mxu0 %v1761
    %1915 = vmatpush1.bf16.msra.mxu0 %v1760
    %1916 = vmatprep.subr.bf16.mxu0 %v1768
    %1917 = vmatpush1.bf16.msra.mxu0 %v1767
    %1918 = vmatprep.mubr.bf16.mxu0 %v1144
    %1919 = vmatmul.mubr.bf16.gmra.mrb[0].mxu0 %v1143
    %v1920 = vpop.f32.mrb[0].mxu0
    %v1921 = vadd.f32 %v1278, %v1920
    %v1922 = vpop.f32.mrb[0].mxu0
    %v1923 = vadd.f32 %v1282, %v1922
    %v1924 = vpop.f32.mrb[0].mxu0
    %v1925 = vpop.f32.mrb[0].mxu0
    %1926 = vdwg.mxu0
    %1927 = vmatprep.subr.bf16.mxu0 %v1665
    %1928 = vmatpush1.bf16.msra.mxu0 %v1664
    %1929 = vmatprep.subr.bf16.mxu0 %v1672
    %1930 = vmatpush1.bf16.msra.mxu0 %v1671
    %1931 = vmatprep.subr.bf16.mxu0 %v1679
    %1932 = vmatpush1.bf16.msra.mxu0 %v1678
    %1933 = vmatprep.subr.bf16.mxu0 %v1686
    %1934 = vmatpush1.bf16.msra.mxu0 %v1685
    %1935 = vmatprep.subr.bf16.mxu0 %v1693
    %1936 = vmatpush1.bf16.msra.mxu0 %v1692
    %1937 = vmatprep.subr.bf16.mxu0 %v1700
    %1938 = vmatpush1.bf16.msra.mxu0 %v1699
    %1939 = vmatprep.subr.bf16.mxu0 %v1707
    %1940 = vmatpush1.bf16.msra.mxu0 %v1706
    %1941 = vmatprep.subr.bf16.mxu0 %v1714
    %1942 = vmatpush1.bf16.msra.mxu0 %v1713
    %1943 = vmatprep.subr.bf16.mxu0 %v1721
    %1944 = vmatpush1.bf16.msra.mxu0 %v1720
    %1945 = vmatprep.subr.bf16.mxu0 %v1728
    %1946 = vmatpush1.bf16.msra.mxu0 %v1727
    %1947 = vmatprep.subr.bf16.mxu0 %v1735
    %1948 = vmatpush1.bf16.msra.mxu0 %v1734
    %1949 = vmatprep.subr.bf16.mxu0 %v1742
    %1950 = vmatpush1.bf16.msra.mxu0 %v1741
    %1951 = vmatprep.subr.bf16.mxu0 %v1749
    %1952 = vmatpush1.bf16.msra.mxu0 %v1748
    %1953 = vmatprep.subr.bf16.mxu0 %v1756
    %1954 = vmatpush1.bf16.msra.mxu0 %v1755
    %1955 = vmatprep.subr.bf16.mxu0 %v1763
    %1956 = vmatpush1.bf16.msra.mxu0 %v1762
    %1957 = vmatprep.subr.bf16.mxu0 %v1770
    %1958 = vmatpush1.bf16.msra.mxu0 %v1769
    %1959 = vmatprep.mubr.bf16.mxu0 %v1144
    %1960 = vmatmul.mubr.bf16.gmra.mrb[0].mxu0 %v1143
    %v1961 = vpop.f32.mrb[0].mxu0
    %v1962 = vadd.f32 %v1286, %v1961
    %v1963 = vpop.f32.mrb[0].mxu0
    %v1964 = vadd.f32 %v1290, %v1963
    %v1965 = vpop.f32.mrb[0].mxu0
    %v1966 = vpop.f32.mrb[0].mxu0
    %1967 = vdwg.mxu0
    %1968 = vmatprep.subr.bf16.mxu0 %v1667
    %1969 = vmatpush1.bf16.msra.mxu0 %v1666
    %1970 = vmatprep.subr.bf16.mxu0 %v1674
    %1971 = vmatpush1.bf16.msra.mxu0 %v1673
    %1972 = vmatprep.subr.bf16.mxu0 %v1681
    %1973 = vmatpush1.bf16.msra.mxu0 %v1680
    %1974 = vmatprep.subr.bf16.mxu0 %v1688
    %1975 = vmatpush1.bf16.msra.mxu0 %v1687
    %1976 = vmatprep.subr.bf16.mxu0 %v1695
    %1977 = vmatpush1.bf16.msra.mxu0 %v1694
    %1978 = vmatprep.subr.bf16.mxu0 %v1702
    %1979 = vmatpush1.bf16.msra.mxu0 %v1701
    %1980 = vmatprep.subr.bf16.mxu0 %v1709
    %1981 = vmatpush1.bf16.msra.mxu0 %v1708
    %1982 = vmatprep.subr.bf16.mxu0 %v1716
    %1983 = vmatpush1.bf16.msra.mxu0 %v1715
    %1984 = vmatprep.subr.bf16.mxu0 %v1723
    %1985 = vmatpush1.bf16.msra.mxu0 %v1722
    %1986 = vmatprep.subr.bf16.mxu0 %v1730
    %1987 = vmatpush1.bf16.msra.mxu0 %v1729
    %1988 = vmatprep.subr.bf16.mxu0 %v1737
    %1989 = vmatpush1.bf16.msra.mxu0 %v1736
    %1990 = vmatprep.subr.bf16.mxu0 %v1744
    %1991 = vmatpush1.bf16.msra.mxu0 %v1743
    %1992 = vmatprep.subr.bf16.mxu0 %v1751
    %1993 = vmatpush1.bf16.msra.mxu0 %v1750
    %1994 = vmatprep.subr.bf16.mxu0 %v1758
    %1995 = vmatpush1.bf16.msra.mxu0 %v1757
    %1996 = vmatprep.subr.bf16.mxu0 %v1765
    %1997 = vmatpush1.bf16.msra.mxu0 %v1764
    %1998 = vmatprep.subr.bf16.mxu0 %v1772
    %1999 = vmatpush1.bf16.msra.mxu0 %v1771
    %2000 = vmatprep.mubr.bf16.mxu0 %v1144
    %2001 = vmatmul.mubr.bf16.gmra.mrb[0].mxu0 %v1143
    %v2002 = vpop.f32.mrb[0].mxu0
    %v2003 = vadd.f32 %v1294, %v2002
    %v2004 = vpop.f32.mrb[0].mxu0
    %v2005 = vadd.f32 %v1298, %v2004
    %v2006 = vpop.f32.mrb[0].mxu0
    %v2007 = vpop.f32.mrb[0].mxu0
    %2008 = vdwg.mxu0
    %2009 = vmatprep.subr.bf16.mxu0 0
    %2010 = vmatpush1.bf16.msra.mxu0 %v1668
    %2011 = vmatprep.subr.bf16.mxu0 0
    %2012 = vmatpush1.bf16.msra.mxu0 %v1675
    %2013 = vmatprep.subr.bf16.mxu0 0
    %2014 = vmatpush1.bf16.msra.mxu0 %v1682
    %2015 = vmatprep.subr.bf16.mxu0 0
    %2016 = vmatpush1.bf16.msra.mxu0 %v1689
    %2017 = vmatprep.subr.bf16.mxu0 0
    %2018 = vmatpush1.bf16.msra.mxu0 %v1696
    %2019 = vmatprep.subr.bf16.mxu0 0
    %2020 = vmatpush1.bf16.msra.mxu0 %v1703
    %2021 = vmatprep.subr.bf16.mxu0 0
    %2022 = vmatpush1.bf16.msra.mxu0 %v1710
    %2023 = vmatprep.subr.bf16.mxu0 0
    %2024 = vmatpush1.bf16.msra.mxu0 %v1717
    %2025 = vmatprep.subr.bf16.mxu0 0
    %2026 = vmatpush1.bf16.msra.mxu0 %v1724
    %2027 = vmatprep.subr.bf16.mxu0 0
    %2028 = vmatpush1.bf16.msra.mxu0 %v1731
    %2029 = vmatprep.subr.bf16.mxu0 0
    %2030 = vmatpush1.bf16.msra.mxu0 %v1738
    %2031 = vmatprep.subr.bf16.mxu0 0
    %2032 = vmatpush1.bf16.msra.mxu0 %v1745
    %2033 = vmatprep.subr.bf16.mxu0 0
    %2034 = vmatpush1.bf16.msra.mxu0 %v1752
    %2035 = vmatprep.subr.bf16.mxu0 0
    %2036 = vmatpush1.bf16.msra.mxu0 %v1759
    %2037 = vmatprep.subr.bf16.mxu0 0
    %2038 = vmatpush1.bf16.msra.mxu0 %v1766
    %2039 = vmatprep.subr.bf16.mxu0 0
    %2040 = vmatpush1.bf16.msra.mxu0 %v1773
    %2041 = vmatprep.mubr.bf16.mxu0 %v1144
    %2042 = vmatmul.mubr.bf16.gmra.mrb[0].mxu0 %v1143
    %v2043 = vpop.f32.mrb[0].mxu0
    %v2044 = vadd.f32 %v1302, %v2043
    %v2045 = vpop.f32.mrb[0].mxu0
    %v2046 = vpop.f32.mrb[0].mxu0
    %v2047 = vpop.f32.mrb[0].mxu0
    %2048 = vdwg.mxu0
    %v2049 = vxor.u32 %v1921, 2147483648
    %v2050 = vxor.u32 %v1923, 2147483648
    %v2051 = vxor.u32 %v1962, 2147483648
    %v2052 = vxor.u32 %v1964, 2147483648
    %v2053 = vxor.u32 %v2003, 2147483648
    %v2054 = vxor.u32 %v2005, 2147483648
    %v2055 = vxor.u32 %v2044, 2147483648
    %v2056 = vmul.f32 %v2049, 1.442695
    %v2057 = vpow.pop %v2056
    %v2058 = vmul.f32 %v2050, 1.442695
    %v2059 = vpow.pop %v2058
    %v2060 = vmul.f32 %v2051, 1.442695
    %v2061 = vpow.pop %v2060
    %v2062 = vmul.f32 %v2052, 1.442695
    %v2063 = vpow.pop %v2062
    %v2064 = vmul.f32 %v2053, 1.442695
    %v2065 = vpow.pop %v2064
    %v2066 = vmul.f32 %v2054, 1.442695
    %v2067 = vpow.pop %v2066
    %v2068 = vmul.f32 %v2055, 1.442695
    %v2069 = vpow.pop %v2068
    %v2070 = vadd.f32 %v2057, 1.0
    %v2071 = vadd.f32 %v2059, 1.0
    %v2072 = vadd.f32 %v2061, 1.0
    %v2073 = vadd.f32 %v2063, 1.0
    %v2074 = vadd.f32 %v2065, 1.0
    %v2075 = vadd.f32 %v2067, 1.0
    %v2076 = vadd.f32 %v2069, 1.0
    %v2077 = vrcp.pop %v2070
    %v2078 = vmul.f32 1.0, %v2077
    %v2079 = vrcp.pop %v2071
    %v2080 = vmul.f32 1.0, %v2079
    %v2081 = vrcp.pop %v2072
    %v2082 = vmul.f32 1.0, %v2081
    %v2083 = vrcp.pop %v2073
    %v2084 = vmul.f32 1.0, %v2083
    %v2085 = vrcp.pop %v2074
    %v2086 = vmul.f32 1.0, %v2085
    %v2087 = vrcp.pop %v2075
    %v2088 = vmul.f32 1.0, %v2087
    %v2089 = vrcp.pop %v2076
    %v2090 = vmul.f32 1.0, %v2089
    %v2098 = vcombine.low %v2078, %v2080
    %v2099 = vcombine.low %v2082, %v2084
    %v2101 = vunpack.c.l.s4 1983009808
    %v2102 = vunpack.c.0.s8 %v2101
    %v2103 = vlaneseq
    %v2104 = vshrl.u32 %v2103, 7
    %v2105 = vsub.s32 %v2102, %v2104
    %v2106 = vrot.slane %v2098, %v2105
    %v2108 = vunpack.c.l.s4 1983009808
    %v2109 = vunpack.c.0.s8 %v2108
    %v2110 = vlaneseq
    %v2111 = vshrl.u32 %v2110, 7
    %v2112 = vsub.s32 %v2109, %v2111
    %v2113 = vrot.slane %v2099, %v2112
    %v2114 = vcombine.low %v2106, %v2113
    %v2115 = vcombine.low %v2086, %v2088
    %v2117 = vunpack.c.l.s4 1983009808
    %v2118 = vunpack.c.0.s8 %v2117
    %v2119 = vlaneseq
    %v2120 = vshrl.u32 %v2119, 7
    %v2121 = vsub.s32 %v2118, %v2120
    %v2122 = vrot.slane %v2115, %v2121
    %v2124 = vunpack.c.l.s4 1983009808
    %v2125 = vunpack.c.0.s8 %v2124
    %v2126 = vlaneseq
    %v2127 = vshrl.u32 %v2126, 7
    %v2128 = vsub.s32 %v2125, %v2127
    %v2129 = vrot.slane %v2090, %v2128
    %v2130 = vcombine.low %v2122, %v2129
    %2133 = vst [vmem:[#allocation2] sm:$0xff] %v2114
    %vm2134 = vcmask 1041408
    %vm2135 = vcmask 1043458
    %vm2136 = vmor %vm2135, %vm2134
    %vm2137 = vcmask 128004
    %vm2138 = vmor %vm2137, %vm2136
    %2139 = vst.msk [vmem:[#allocation2 + $0x8] sm:$0x3f] %vm2138, %v2130
    %v2140 = vmul.f32 %v36, %v2114
    %v2141 = vmul.f32 %v37, %v2130
    %2142 = vst [vmem:[%s9] sm:$0xff] %v2140
    %2143 = vst.msk [vmem:[%s9 + $0x8] sm:$0x3f] %vm2138, %v2141
    // Predicated region
    $region38: #{dense_explainer_forward.1} parent=1 // pred_check
      _
    $region39: #{dense_explainer_forward.1} parent=1 // pred_check_branch
      %2145 = sbr.rel (0) target = $region41
    $region40: #{dense_explainer_forward.1} parent=1 // pred_region
      _
    $region41: #{dense_explainer_forward.1} parent=1 // pred_fallthru
      _
    // Predicated region
    $region42: #{dense_explainer_forward.1} parent=1 // pred_check
      _
    $region43: #{dense_explainer_forward.1} parent=1 // pred_check_branch
      %2147 = sbr.rel (0) target = $region45
    $region44: #{dense_explainer_forward.1} parent=1 // pred_region
      %s2149 = ssub.s32 224, 224
      %2150 = vsyncadd [#allocation3], %s2149
      %s2152 = sshll.u32 [#allocation2], 4
      %s2153 = int_to_ptr.vmem [resolvable:$true] %s2152
      %2155 = dma.vmem_to_hbm [thread:$0]  %s2153, 224, %s10, [#allocation3]
    $region45: #{dense_explainer_forward.1} parent=1 // pred_fallthru
      _
    // Predicated region
    $region46: #{dense_explainer_forward.1} parent=1 // pred_check
      _
    $region47: #{dense_explainer_forward.1} parent=1 // pred_check_branch
      %2157 = sbr.rel (0) target = $region49
    $region48: #{dense_explainer_forward.1} parent=1 // pred_region
      _
    $region49: #{dense_explainer_forward.1} parent=1 // pred_fallthru
      _
    // Predicated region
    $region50: #{dense_explainer_forward.1} parent=1 // pred_check
      _
    $region51: #{dense_explainer_forward.1} parent=1 // pred_check_branch
      %2159 = sbr.rel (0) target = $region53
    $region52: #{dense_explainer_forward.1} parent=1 // pred_region
      %2160 = dma.done [#allocation3], 224
    $region53: #{dense_explainer_forward.1} parent=1 // pred_fallthru
      _
    %2161 = vsyncpa [#allocation3], 1

</llo_original>
